<compile_context>
chip_gen: v5e
topology: v5e:2x2
jax: 0.10.0
libtpu: 0.0.40
codegen_flags: <defaults>
</compile_context>

<pallas_src>
import functools

import jax
import jax.numpy as jnp
from jax import lax
from jax.experimental import pallas as pl
from jax.experimental.pallas import tpu as pltpu


def _activation(v, act_name):
    if act_name == "relu":
        return jnp.maximum(v, 0.0)
    elif act_name == "hardswish":
        return v * jnp.clip(v / 6.0 + 0.5, 0.0, 1.0)
    else:
        raise ValueError(f"unsupported activation: {act_name}")


def _dw_edge_masks(H, W, K):
    """Per-tap validity masks within one image, shape (K*K, H*W), f32 {0,1}."""
    p = K // 2
    hh = jnp.arange(H)[:, None]
    ww = jnp.arange(W)[None, :]
    rows = []
    for dy in range(-p, p + 1):
        for dx in range(-p, p + 1):
            valid = ((hh + dy >= 0) & (hh + dy < H) &
                     (ww + dx >= 0) & (ww + dx < W)).astype(jnp.float32)   # (H, W)
            rows.append(valid.reshape(H * W))
    return jnp.stack(rows, axis=0)                                          # (K*K, H*W)


def _make_kernel(N, E, Cout, H, W, K, has_expand, use_se, use_res, act_name):
    HW = H * W
    p = K // 2
    center = p * K + p
    act = functools.partial(_activation, act_name=act_name)

    def kernel(*refs):
        i = 0
        x_ref = refs[i]; i += 1
        if has_expand:
            w_exp_ref, exp_b_ref = refs[i:i + 2]; i += 2
        comb_ref, dw_b_ref = refs[i:i + 2]; i += 2
        if use_se:
            w_se1_ref, b_se1_ref, w_se2_ref, b_se2_ref = refs[i:i + 4]; i += 4
        w_proj_ref, proj_b_ref = refs[i:i + 2]; i += 2
        o_ref = refs[i]

        xv = x_ref[...].astype(jnp.float32)                    # (N, Cin, HW)

        # ---- 1x1 expand conv (BN scale pre-folded into weights) + bias + act --
        # Cin broadcast-MACs on the VPU: at 8/16 channels the MXU is <2%
        # utilized and its pack/drain latency sits on the serial path.
        if has_expand:
            w_exp = w_exp_ref[...]                             # (E, Cin)
            h = xv[:, 0:1, :] * w_exp[:, 0:1]                  # (N, E, HW)
            for c in range(1, w_exp.shape[1]):
                h = h + xv[:, c:c + 1, :] * w_exp[:, c:c + 1]
            h = act(h + exp_b_ref[...])                        # bias (E, 1)
        else:
            h = xv                                             # Cin == E

        # ---- KxK depthwise conv, stride 1, SAME padding (XLU rolls + VPU) ----
        # comb_ref[tap] = (BN-scaled dw weight) x (edge-validity mask), shape
        # (N*E, HW): one vld + one mul + one add per vreg per tap.  Each row
        # of the (N*E, HW) view holds exactly one image's spatial extent, so
        # the roll wrap can only cross image rows, which the mask zeroes.
        h2 = h.reshape(N * E, HW)                              # free: E % 8 == 0
        acc = h2 * comb_ref[center]                            # center tap (mask == 1)
        for dy in range(-p, p + 1):
            for dx in range(-p, p + 1):
                tap = (dy + p) * K + (dx + p)
                if tap == center:
                    continue
                delta = dy * W + dx
                shifted = pltpu.roll(h2, shift=(-delta) % HW, axis=1)
                acc = acc + shifted * comb_ref[tap]
        d = act(acc.reshape(N, E, HW) + dw_b_ref[...])         # (N, E, HW)

        # ---- Squeeze-and-Excite (pure VPU/XLU; gate built once, one multiply) --
        if use_se:
            pooled = jnp.sum(d, axis=2, keepdims=True) * (1.0 / HW)        # (N, E, 1)
            z1 = jnp.sum(w_se1_ref[...] * pooled, axis=1, keepdims=True)   # (N, 1, Er)
            z1 = jnp.maximum(z1 + b_se1_ref[...], 0.0)                     # ReLU
            z2 = jnp.sum(w_se2_ref[...] * z1, axis=2, keepdims=True)       # (N, E, 1)
            z2 = z2 + b_se2_ref[...]
            gate = jnp.clip(z2 * (1.0 / 6.0) + 0.5, 0.0, 1.0)              # hardsigmoid
            d = d * gate

        # ---- 1x1 project conv (BN scale pre-folded) + bias (+ residual) -------
        w_proj = w_proj_ref[...]                               # (Cout, E)
        o = d[:, 0:1, :] * w_proj[:, 0:1]                      # (N, Cout, HW)
        for e in range(1, E):
            o = o + d[:, e:e + 1, :] * w_proj[:, e:e + 1]
        o = o + proj_b_ref[...]                                # (Cout, 1)
        if use_res:
            o = o + xv                                         # Cin == Cout

        o_ref[...] = o.astype(o_ref.dtype)                     # lane-dense (HW = 256)

    return kernel


def prepare_kernel_params(params, *, N, H, W, kernel_size, use_se):
    """One-time host-side prep (zero per-call cost in a real deployment):
    fold the eval-mode BN scales into the conv weights, pre-combine the
    depthwise weights with the edge-validity masks (tiled over the batch),
    and drop the expand conv when in_dim == exp_dim."""
    K = kernel_size
    E = params["w_dw"].shape[0]
    Cin = params["w_exp"].shape[1]
    kp = {}
    if Cin != E:
        kp["w_exp"] = params["w_exp"] * params["exp_s"]        # (E, Cin)
        kp["exp_b"] = params["exp_b"]                          # (E, 1)
    w_dw_s = params["w_dw"] * params["dw_s"]                   # (E, K*K)
    mask = _dw_edge_masks(H, W, K)                             # (K*K, HW)
    comb = w_dw_s.T[:, :, None] * mask[:, None, :]             # (K*K, E, HW)
    kp["dw_comb"] = jnp.tile(comb, (1, N, 1))                  # (K*K, N*E, HW)
    kp["dw_b"] = params["dw_b"]                                # (E, 1)
    if use_se:
        kp["w_se1"] = params["w_se1"]                          # (E, Er)
        kp["b_se1"] = params["b_se1"]                          # (1, Er)
        kp["w_se2"] = params["w_se2"]                          # (E, Er)
        kp["b_se2"] = params["b_se2"]                          # (E, 1)
    kp["w_proj"] = params["w_proj"] * params["proj_s"]         # (Cout, E)
    kp["proj_b"] = params["proj_b"]                            # (Cout, 1)
    return jax.tree_util.tree_map(lambda a: jnp.asarray(a, jnp.float32), kp)


def mobile_bottleneck(x_nchw, kp, *, kernel_size, stride, act_name):
    N, Cin, H, W = x_nchw.shape
    K = kernel_size
    assert stride == 1, "TODO(synk): only stride=1 depthwise is implemented"
    HW = H * W
    E = kp["dw_b"].shape[0]
    Cout = kp["w_proj"].shape[0]
    has_expand = "w_exp" in kp
    use_se = "w_se1" in kp
    use_res = (stride == 1) and (Cin == Cout)
    assert kp["dw_comb"].shape == (K * K, N * E, HW), \
        "kernel params were prepared for a different (N, H, W)"

    # NCHW kept natively: only a free reshape at the boundary, no transposes.
    x = x_nchw.reshape(N, Cin, HW).astype(jnp.float32)

    args = [x]
    if has_expand:
        args += [kp["w_exp"], kp["exp_b"]]
    args += [kp["dw_comb"], kp["dw_b"]]
    if use_se:
        args += [kp["w_se1"], kp["b_se1"], kp["w_se2"], kp["b_se2"]]
    args += [kp["w_proj"], kp["proj_b"]]

    kernel = _make_kernel(N, E, Cout, H, W, K, has_expand, use_se, use_res, act_name)

    vmem = pl.BlockSpec(memory_space=pltpu.MemorySpace.VMEM)
    y = pl.pallas_call(
        kernel,
        out_shape=jax.ShapeDtypeStruct((N, Cout, HW), jnp.float32),
        in_specs=[vmem] * len(args),      # whole arrays in VMEM, no grid /
        out_specs=vmem,                   # pipeline machinery for this size
    )(*args)

    return y.reshape(N, Cout, H, W)


# ----------------------------- parameter setup ------------------------------

def _fold_bn(gamma, beta, mean, var, eps=1e-5):
    scale = gamma / jnp.sqrt(var + eps)
    bias = beta - mean * scale
    return scale[:, None], bias[:, None]                       # (C, 1)


def init_params(key, Cin, E, Cout, K, reduction=4):
    Er = E // reduction
    ks = jax.random.split(key, 20)

    def nrm(k, shape, s=0.1):
        return jax.random.normal(k, shape, jnp.float32) * s

    # 1x1 expand conv: PyTorch (E, Cin, 1, 1) -> (E, Cin)
    w_exp = nrm(ks[0], (E, Cin))
    exp_s, exp_b = _fold_bn(1.0 + nrm(ks[1], (E,)), nrm(ks[2], (E,)),
                            nrm(ks[3], (E,)), 1.0 + 0.5 * jnp.abs(nrm(ks[4], (E,))))
    # depthwise KxK conv: PyTorch (E, 1, K, K) -> (E, K*K), col = i*K + j
    w_dw = nrm(ks[5], (E, K * K))
    dw_s, dw_b = _fold_bn(1.0 + nrm(ks[6], (E,)), nrm(ks[7], (E,)),
                          nrm(ks[8], (E,)), 1.0 + 0.5 * jnp.abs(nrm(ks[9], (E,))))
    # SE 1x1 convs (with bias); w_se1 stored transposed as (E, Er)
    w_se1 = nrm(ks[10], (E, Er))
    b_se1 = nrm(ks[11], (1, Er))
    w_se2 = nrm(ks[12], (E, Er))          # PyTorch (E, Er)
    b_se2 = nrm(ks[13], (E, 1))
    # 1x1 project conv: PyTorch (Cout, E, 1, 1) -> (Cout, E)
    w_proj = nrm(ks[14], (Cout, E))
    proj_s, proj_b = _fold_bn(1.0 + nrm(ks[15], (Cout,)), nrm(ks[16], (Cout,)),
                              nrm(ks[17], (Cout,)),
                              1.0 + 0.5 * jnp.abs(nrm(ks[18], (Cout,))))
    return dict(w_exp=w_exp, exp_s=exp_s, exp_b=exp_b,
                w_dw=w_dw, dw_s=dw_s, dw_b=dw_b,
                w_se1=w_se1, b_se1=b_se1, w_se2=w_se2, b_se2=b_se2,
                w_proj=w_proj, proj_s=proj_s, proj_b=proj_b)


# ----------------------------- pure-JAX reference ---------------------------

def ref_forward(x_nchw, params, *, kernel_size, stride, use_se, act_name):
    K = kernel_size
    p = K // 2
    x = x_nchw.astype(jnp.float32)
    N, Cin, H, W = x.shape
    E = params["w_dw"].shape[0]
    Cout = params["w_proj"].shape[0]
    act = functools.partial(_activation, act_name=act_name)
    hp = lax.Precision.HIGHEST

    if Cin != E:
        h = jnp.einsum("ec,nchw->nehw", params["w_exp"], x, precision=hp)
        h = act(h * params["exp_s"].reshape(1, E, 1, 1)
                + params["exp_b"].reshape(1, E, 1, 1))
    else:
        h = x

    w_dw = params["w_dw"].reshape(E, 1, K, K)
    d = lax.conv_general_dilated(h, w_dw, (stride, stride), [(p, p), (p, p)],
                                 dimension_numbers=("NCHW", "OIHW", "NCHW"),
                                 feature_group_count=E, precision=hp)
    d = act(d * params["dw_s"].reshape(1, E, 1, 1)
            + params["dw_b"].reshape(1, E, 1, 1))

    if use_se:
        pooled = jnp.mean(d, axis=(2, 3))                               # (N, E)
        z1 = jnp.einsum("ne,er->nr", pooled, params["w_se1"],
                        precision=hp) + params["b_se1"][0]
        z1 = jnp.maximum(z1, 0.0)
        z2 = jnp.einsum("nr,er->ne", z1, params["w_se2"],
                        precision=hp) + params["b_se2"][:, 0]
        gate = jnp.clip(z2 / 6.0 + 0.5, 0.0, 1.0)
        d = d * gate[:, :, None, None]

    o = jnp.einsum("oe,nehw->nohw", params["w_proj"], d, precision=hp)
    o = o * params["proj_s"].reshape(1, Cout, 1, 1) \
        + params["proj_b"].reshape(1, Cout, 1, 1)
    if stride == 1 and Cin == Cout:
        o = o + x
    return o


if __name__ == "__main__":
    # MobileBottleneck(in_dim=8, exp_dim=16, out_dim=8, kernel_size=3,
    #                  use_se=True, activation=nn.Hardswish, stride=1)
    N, Cin, H, W = 2, 8, 16, 16
    E, Cout, K, stride = 16, 8, 3, 1
    use_se, act_name = True, "hardswish"

    key = jax.random.PRNGKey(0)
    params = init_params(key, Cin, E, Cout, K)
    x = jax.random.normal(jax.random.fold_in(key, 99), (N, Cin, H, W), jnp.float32)

    kp = prepare_kernel_params(params, N=N, H=H, W=W, kernel_size=K, use_se=use_se)
    y = mobile_bottleneck(x, kp, kernel_size=K, stride=stride, act_name=act_name)
    y = jax.block_until_ready(y)

    y_ref = ref_forward(x, params, kernel_size=K, stride=stride,
                        use_se=use_se, act_name=act_name)
    assert y.shape == (N, Cout, H, W)
    err = float(jnp.max(jnp.abs(y - y_ref)))
    # Full f32 math on both sides (BN fold only reorders f32 ops).
    assert err < 1e-3, f"mismatch vs reference, max abs err = {err}"
    print("KERNEL_OK")
</pallas_src>

<mosaic_0001>
module attributes {stable_mosaic.version = 11 : i64} {
  func.func @kernel(%arg0: memref<2x8x256xf32, #tpu.memory_space<vmem>>, %arg1: memref<16x8xf32, #tpu.memory_space<vmem>>, %arg2: memref<16x1xf32, #tpu.memory_space<vmem>>, %arg3: memref<9x32x256xf32, #tpu.memory_space<vmem>>, %arg4: memref<16x1xf32, #tpu.memory_space<vmem>>, %arg5: memref<16x4xf32, #tpu.memory_space<vmem>>, %arg6: memref<1x4xf32, #tpu.memory_space<vmem>>, %arg7: memref<16x4xf32, #tpu.memory_space<vmem>>, %arg8: memref<16x1xf32, #tpu.memory_space<vmem>>, %arg9: memref<8x16xf32, #tpu.memory_space<vmem>>, %arg10: memref<8x1xf32, #tpu.memory_space<vmem>>, %arg11: memref<2x8x256xf32, #tpu.memory_space<vmem>>) attributes {dimension_semantics = [], scalar_prefetch = 0 : i64, scratch_operands = 0 : i64, tpu.core_type = #tpu.core_type<tc>} {
    %c0 = arith.constant 0 : index
    %c0_0 = arith.constant 0 : index
    %c0_1 = arith.constant 0 : index
    %0 = vector.load %arg0[%c0, %c0_0, %c0_1] : memref<2x8x256xf32, #tpu.memory_space<vmem>>, vector<2x8x256xf32>
    %c0_2 = arith.constant 0 : index
    %c0_3 = arith.constant 0 : index
    %1 = vector.load %arg1[%c0_2, %c0_3] : memref<16x8xf32, #tpu.memory_space<vmem>>, vector<16x8xf32>
    %2 = vector.extract_strided_slice %0 {offsets = [0, 0, 0], sizes = [2, 1, 256], strides = [1, 1, 1]} : vector<2x8x256xf32> to vector<2x1x256xf32>
    %3 = vector.extract_strided_slice %1 {offsets = [0, 0], sizes = [16, 1], strides = [1, 1]} : vector<16x8xf32> to vector<16x1xf32>
    %4 = vector.shape_cast %3 : vector<16x1xf32> to vector<1x16x1xf32>
    %5 = vector.broadcast %2 : vector<2x1x256xf32> to vector<2x16x256xf32>
    %6 = vector.broadcast %4 : vector<1x16x1xf32> to vector<2x16x256xf32>
    %7 = arith.mulf %5, %6 : vector<2x16x256xf32>
    %8 = vector.extract_strided_slice %0 {offsets = [0, 1, 0], sizes = [2, 1, 256], strides = [1, 1, 1]} : vector<2x8x256xf32> to vector<2x1x256xf32>
    %9 = vector.extract_strided_slice %1 {offsets = [0, 1], sizes = [16, 1], strides = [1, 1]} : vector<16x8xf32> to vector<16x1xf32>
    %10 = vector.shape_cast %9 : vector<16x1xf32> to vector<1x16x1xf32>
    %11 = vector.broadcast %8 : vector<2x1x256xf32> to vector<2x16x256xf32>
    %12 = vector.broadcast %10 : vector<1x16x1xf32> to vector<2x16x256xf32>
    %13 = arith.mulf %11, %12 : vector<2x16x256xf32>
    %14 = arith.addf %7, %13 : vector<2x16x256xf32>
    %15 = vector.extract_strided_slice %0 {offsets = [0, 2, 0], sizes = [2, 1, 256], strides = [1, 1, 1]} : vector<2x8x256xf32> to vector<2x1x256xf32>
    %16 = vector.extract_strided_slice %1 {offsets = [0, 2], sizes = [16, 1], strides = [1, 1]} : vector<16x8xf32> to vector<16x1xf32>
    %17 = vector.shape_cast %16 : vector<16x1xf32> to vector<1x16x1xf32>
    %18 = vector.broadcast %15 : vector<2x1x256xf32> to vector<2x16x256xf32>
    %19 = vector.broadcast %17 : vector<1x16x1xf32> to vector<2x16x256xf32>
    %20 = arith.mulf %18, %19 : vector<2x16x256xf32>
    %21 = arith.addf %14, %20 : vector<2x16x256xf32>
    %22 = vector.extract_strided_slice %0 {offsets = [0, 3, 0], sizes = [2, 1, 256], strides = [1, 1, 1]} : vector<2x8x256xf32> to vector<2x1x256xf32>
    %23 = vector.extract_strided_slice %1 {offsets = [0, 3], sizes = [16, 1], strides = [1, 1]} : vector<16x8xf32> to vector<16x1xf32>
    %24 = vector.shape_cast %23 : vector<16x1xf32> to vector<1x16x1xf32>
    %25 = vector.broadcast %22 : vector<2x1x256xf32> to vector<2x16x256xf32>
    %26 = vector.broadcast %24 : vector<1x16x1xf32> to vector<2x16x256xf32>
    %27 = arith.mulf %25, %26 : vector<2x16x256xf32>
    %28 = arith.addf %21, %27 : vector<2x16x256xf32>
    %29 = vector.extract_strided_slice %0 {offsets = [0, 4, 0], sizes = [2, 1, 256], strides = [1, 1, 1]} : vector<2x8x256xf32> to vector<2x1x256xf32>
    %30 = vector.extract_strided_slice %1 {offsets = [0, 4], sizes = [16, 1], strides = [1, 1]} : vector<16x8xf32> to vector<16x1xf32>
    %31 = vector.shape_cast %30 : vector<16x1xf32> to vector<1x16x1xf32>
    %32 = vector.broadcast %29 : vector<2x1x256xf32> to vector<2x16x256xf32>
    %33 = vector.broadcast %31 : vector<1x16x1xf32> to vector<2x16x256xf32>
    %34 = arith.mulf %32, %33 : vector<2x16x256xf32>
    %35 = arith.addf %28, %34 : vector<2x16x256xf32>
    %36 = vector.extract_strided_slice %0 {offsets = [0, 5, 0], sizes = [2, 1, 256], strides = [1, 1, 1]} : vector<2x8x256xf32> to vector<2x1x256xf32>
    %37 = vector.extract_strided_slice %1 {offsets = [0, 5], sizes = [16, 1], strides = [1, 1]} : vector<16x8xf32> to vector<16x1xf32>
    %38 = vector.shape_cast %37 : vector<16x1xf32> to vector<1x16x1xf32>
    %39 = vector.broadcast %36 : vector<2x1x256xf32> to vector<2x16x256xf32>
    %40 = vector.broadcast %38 : vector<1x16x1xf32> to vector<2x16x256xf32>
    %41 = arith.mulf %39, %40 : vector<2x16x256xf32>
    %42 = arith.addf %35, %41 : vector<2x16x256xf32>
    %43 = vector.extract_strided_slice %0 {offsets = [0, 6, 0], sizes = [2, 1, 256], strides = [1, 1, 1]} : vector<2x8x256xf32> to vector<2x1x256xf32>
    %44 = vector.extract_strided_slice %1 {offsets = [0, 6], sizes = [16, 1], strides = [1, 1]} : vector<16x8xf32> to vector<16x1xf32>
    %45 = vector.shape_cast %44 : vector<16x1xf32> to vector<1x16x1xf32>
    %46 = vector.broadcast %43 : vector<2x1x256xf32> to vector<2x16x256xf32>
    %47 = vector.broadcast %45 : vector<1x16x1xf32> to vector<2x16x256xf32>
    %48 = arith.mulf %46, %47 : vector<2x16x256xf32>
    %49 = arith.addf %42, %48 : vector<2x16x256xf32>
    %50 = vector.extract_strided_slice %0 {offsets = [0, 7, 0], sizes = [2, 1, 256], strides = [1, 1, 1]} : vector<2x8x256xf32> to vector<2x1x256xf32>
    %51 = vector.extract_strided_slice %1 {offsets = [0, 7], sizes = [16, 1], strides = [1, 1]} : vector<16x8xf32> to vector<16x1xf32>
    %52 = vector.shape_cast %51 : vector<16x1xf32> to vector<1x16x1xf32>
    %53 = vector.broadcast %50 : vector<2x1x256xf32> to vector<2x16x256xf32>
    %54 = vector.broadcast %52 : vector<1x16x1xf32> to vector<2x16x256xf32>
    %55 = arith.mulf %53, %54 : vector<2x16x256xf32>
    %56 = arith.addf %49, %55 : vector<2x16x256xf32>
    %c0_4 = arith.constant 0 : index
    %c0_5 = arith.constant 0 : index
    %57 = vector.load %arg2[%c0_4, %c0_5] : memref<16x1xf32, #tpu.memory_space<vmem>>, vector<16x1xf32>
    %58 = vector.shape_cast %57 : vector<16x1xf32> to vector<1x16x1xf32>
    %59 = vector.broadcast %58 : vector<1x16x1xf32> to vector<2x16x256xf32>
    %60 = arith.addf %56, %59 : vector<2x16x256xf32>
    %cst = arith.constant 6.000000e+00 : f32
    %61 = vector.broadcast %cst : f32 to vector<2x16x256xf32>
    %62 = arith.divf %60, %61 : vector<2x16x256xf32>
    %cst_6 = arith.constant 5.000000e-01 : f32
    %63 = vector.broadcast %cst_6 : f32 to vector<2x16x256xf32>
    %64 = arith.addf %62, %63 : vector<2x16x256xf32>
    %cst_7 = arith.constant 0.000000e+00 : f32
    %cst_8 = arith.constant 1.000000e+00 : f32
    %65 = vector.broadcast %cst_7 : f32 to vector<2x16x256xf32>
    %66 = arith.maximumf %65, %64 : vector<2x16x256xf32>
    %67 = vector.broadcast %cst_8 : f32 to vector<2x16x256xf32>
    %68 = arith.minimumf %67, %66 : vector<2x16x256xf32>
    %69 = arith.mulf %60, %68 : vector<2x16x256xf32>
    %70 = vector.shape_cast %69 : vector<2x16x256xf32> to vector<32x256xf32>
    %c4 = arith.constant 4 : index
    %c0_9 = arith.constant 0 : index
    %c0_10 = arith.constant 0 : index
    %71 = vector.load %arg3[%c4, %c0_9, %c0_10] : memref<9x32x256xf32, #tpu.memory_space<vmem>>, vector<1x32x256xf32>
    %72 = vector.shape_cast %71 : vector<1x32x256xf32> to vector<32x256xf32>
    %73 = arith.mulf %70, %72 : vector<32x256xf32>
    %c17_i32 = arith.constant 17 : i32
    %74 = tpu.dynamic_rotate %70 by %c17_i32 dim 1 : vector<32x256xf32>, i32 -> vector<32x256xf32>
    %c0_11 = arith.constant 0 : index
    %c0_12 = arith.constant 0 : index
    %c0_13 = arith.constant 0 : index
    %75 = vector.load %arg3[%c0_11, %c0_12, %c0_13] : memref<9x32x256xf32, #tpu.memory_space<vmem>>, vector<1x32x256xf32>
    %76 = vector.shape_cast %75 : vector<1x32x256xf32> to vector<32x256xf32>
    %77 = arith.mulf %74, %76 : vector<32x256xf32>
    %78 = arith.addf %73, %77 : vector<32x256xf32>
    %c16_i32 = arith.constant 16 : i32
    %79 = tpu.dynamic_rotate %70 by %c16_i32 dim 1 : vector<32x256xf32>, i32 -> vector<32x256xf32>
    %c1 = arith.constant 1 : index
    %c0_14 = arith.constant 0 : index
    %c0_15 = arith.constant 0 : index
    %80 = vector.load %arg3[%c1, %c0_14, %c0_15] : memref<9x32x256xf32, #tpu.memory_space<vmem>>, vector<1x32x256xf32>
    %81 = vector.shape_cast %80 : vector<1x32x256xf32> to vector<32x256xf32>
    %82 = arith.mulf %79, %81 : vector<32x256xf32>
    %83 = arith.addf %78, %82 : vector<32x256xf32>
    %c15_i32 = arith.constant 15 : i32
    %84 = tpu.dynamic_rotate %70 by %c15_i32 dim 1 : vector<32x256xf32>, i32 -> vector<32x256xf32>
    %c2 = arith.constant 2 : index
    %c0_16 = arith.constant 0 : index
    %c0_17 = arith.constant 0 : index
    %85 = vector.load %arg3[%c2, %c0_16, %c0_17] : memref<9x32x256xf32, #tpu.memory_space<vmem>>, vector<1x32x256xf32>
    %86 = vector.shape_cast %85 : vector<1x32x256xf32> to vector<32x256xf32>
    %87 = arith.mulf %84, %86 : vector<32x256xf32>
    %88 = arith.addf %83, %87 : vector<32x256xf32>
    %c1_i32 = arith.constant 1 : i32
    %89 = tpu.dynamic_rotate %70 by %c1_i32 dim 1 : vector<32x256xf32>, i32 -> vector<32x256xf32>
    %c3 = arith.constant 3 : index
    %c0_18 = arith.constant 0 : index
    %c0_19 = arith.constant 0 : index
    %90 = vector.load %arg3[%c3, %c0_18, %c0_19] : memref<9x32x256xf32, #tpu.memory_space<vmem>>, vector<1x32x256xf32>
    %91 = vector.shape_cast %90 : vector<1x32x256xf32> to vector<32x256xf32>
    %92 = arith.mulf %89, %91 : vector<32x256xf32>
    %93 = arith.addf %88, %92 : vector<32x256xf32>
    %c255_i32 = arith.constant 255 : i32
    %94 = tpu.dynamic_rotate %70 by %c255_i32 dim 1 : vector<32x256xf32>, i32 -> vector<32x256xf32>
    %c5 = arith.constant 5 : index
    %c0_20 = arith.constant 0 : index
    %c0_21 = arith.constant 0 : index
    %95 = vector.load %arg3[%c5, %c0_20, %c0_21] : memref<9x32x256xf32, #tpu.memory_space<vmem>>, vector<1x32x256xf32>
    %96 = vector.shape_cast %95 : vector<1x32x256xf32> to vector<32x256xf32>
    %97 = arith.mulf %94, %96 : vector<32x256xf32>
    %98 = arith.addf %93, %97 : vector<32x256xf32>
    %c241_i32 = arith.constant 241 : i32
    %99 = tpu.dynamic_rotate %70 by %c241_i32 dim 1 : vector<32x256xf32>, i32 -> vector<32x256xf32>
    %c6 = arith.constant 6 : index
    %c0_22 = arith.constant 0 : index
    %c0_23 = arith.constant 0 : index
    %100 = vector.load %arg3[%c6, %c0_22, %c0_23] : memref<9x32x256xf32, #tpu.memory_space<vmem>>, vector<1x32x256xf32>
    %101 = vector.shape_cast %100 : vector<1x32x256xf32> to vector<32x256xf32>
    %102 = arith.mulf %99, %101 : vector<32x256xf32>
    %103 = arith.addf %98, %102 : vector<32x256xf32>
    %c240_i32 = arith.constant 240 : i32
    %104 = tpu.dynamic_rotate %70 by %c240_i32 dim 1 : vector<32x256xf32>, i32 -> vector<32x256xf32>
    %c7 = arith.constant 7 : index
    %c0_24 = arith.constant 0 : index
    %c0_25 = arith.constant 0 : index
    %105 = vector.load %arg3[%c7, %c0_24, %c0_25] : memref<9x32x256xf32, #tpu.memory_space<vmem>>, vector<1x32x256xf32>
    %106 = vector.shape_cast %105 : vector<1x32x256xf32> to vector<32x256xf32>
    %107 = arith.mulf %104, %106 : vector<32x256xf32>
    %108 = arith.addf %103, %107 : vector<32x256xf32>
    %c239_i32 = arith.constant 239 : i32
    %109 = tpu.dynamic_rotate %70 by %c239_i32 dim 1 : vector<32x256xf32>, i32 -> vector<32x256xf32>
    %c8 = arith.constant 8 : index
    %c0_26 = arith.constant 0 : index
    %c0_27 = arith.constant 0 : index
    %110 = vector.load %arg3[%c8, %c0_26, %c0_27] : memref<9x32x256xf32, #tpu.memory_space<vmem>>, vector<1x32x256xf32>
    %111 = vector.shape_cast %110 : vector<1x32x256xf32> to vector<32x256xf32>
    %112 = arith.mulf %109, %111 : vector<32x256xf32>
    %113 = arith.addf %108, %112 : vector<32x256xf32>
    %114 = vector.shape_cast %113 : vector<32x256xf32> to vector<2x16x256xf32>
    %c0_28 = arith.constant 0 : index
    %c0_29 = arith.constant 0 : index
    %115 = vector.load %arg4[%c0_28, %c0_29] : memref<16x1xf32, #tpu.memory_space<vmem>>, vector<16x1xf32>
    %116 = vector.shape_cast %115 : vector<16x1xf32> to vector<1x16x1xf32>
    %117 = vector.broadcast %116 : vector<1x16x1xf32> to vector<2x16x256xf32>
    %118 = arith.addf %114, %117 : vector<2x16x256xf32>
    %cst_30 = arith.constant 6.000000e+00 : f32
    %119 = vector.broadcast %cst_30 : f32 to vector<2x16x256xf32>
    %120 = arith.divf %118, %119 : vector<2x16x256xf32>
    %cst_31 = arith.constant 5.000000e-01 : f32
    %121 = vector.broadcast %cst_31 : f32 to vector<2x16x256xf32>
    %122 = arith.addf %120, %121 : vector<2x16x256xf32>
    %cst_32 = arith.constant 0.000000e+00 : f32
    %cst_33 = arith.constant 1.000000e+00 : f32
    %123 = vector.broadcast %cst_32 : f32 to vector<2x16x256xf32>
    %124 = arith.maximumf %123, %122 : vector<2x16x256xf32>
    %125 = vector.broadcast %cst_33 : f32 to vector<2x16x256xf32>
    %126 = arith.minimumf %125, %124 : vector<2x16x256xf32>
    %127 = arith.mulf %118, %126 : vector<2x16x256xf32>
    %cst_34 = arith.constant dense<0.000000e+00> : vector<2x16xf32>
    %128 = vector.multi_reduction <add>, %127, %cst_34 [2] : vector<2x16x256xf32> to vector<2x16xf32>
    %129 = vector.shape_cast %128 : vector<2x16xf32> to vector<2x16x1xf32>
    %cst_35 = arith.constant 3.906250e-03 : f32
    %130 = vector.broadcast %cst_35 : f32 to vector<2x16x1xf32>
    %131 = arith.mulf %129, %130 : vector<2x16x1xf32>
    %c0_36 = arith.constant 0 : index
    %c0_37 = arith.constant 0 : index
    %132 = vector.load %arg5[%c0_36, %c0_37] : memref<16x4xf32, #tpu.memory_space<vmem>>, vector<16x4xf32>
    %133 = vector.shape_cast %132 : vector<16x4xf32> to vector<1x16x4xf32>
    %134 = vector.broadcast %133 : vector<1x16x4xf32> to vector<2x16x4xf32>
    %135 = vector.broadcast %131 : vector<2x16x1xf32> to vector<2x16x4xf32>
    %136 = arith.mulf %134, %135 : vector<2x16x4xf32>
    %cst_38 = arith.constant dense<0.000000e+00> : vector<2x4xf32>
    %137 = vector.multi_reduction <add>, %136, %cst_38 [1] : vector<2x16x4xf32> to vector<2x4xf32>
    %138 = vector.shape_cast %137 : vector<2x4xf32> to vector<2x1x4xf32>
    %c0_39 = arith.constant 0 : index
    %c0_40 = arith.constant 0 : index
    %139 = vector.load %arg6[%c0_39, %c0_40] : memref<1x4xf32, #tpu.memory_space<vmem>>, vector<1x4xf32>
    %140 = vector.shape_cast %139 : vector<1x4xf32> to vector<1x1x4xf32>
    %141 = vector.broadcast %140 : vector<1x1x4xf32> to vector<2x1x4xf32>
    %142 = arith.addf %138, %141 : vector<2x1x4xf32>
    %cst_41 = arith.constant 0.000000e+00 : f32
    %143 = vector.broadcast %cst_41 : f32 to vector<2x1x4xf32>
    %144 = arith.maximumf %142, %143 : vector<2x1x4xf32>
    %c0_42 = arith.constant 0 : index
    %c0_43 = arith.constant 0 : index
    %145 = vector.load %arg7[%c0_42, %c0_43] : memref<16x4xf32, #tpu.memory_space<vmem>>, vector<16x4xf32>
    %146 = vector.shape_cast %145 : vector<16x4xf32> to vector<1x16x4xf32>
    %147 = vector.broadcast %146 : vector<1x16x4xf32> to vector<2x16x4xf32>
    %148 = vector.broadcast %144 : vector<2x1x4xf32> to vector<2x16x4xf32>
    %149 = arith.mulf %147, %148 : vector<2x16x4xf32>
    %cst_44 = arith.constant dense<0.000000e+00> : vector<2x16xf32>
    %150 = vector.multi_reduction <add>, %149, %cst_44 [2] : vector<2x16x4xf32> to vector<2x16xf32>
    %151 = vector.shape_cast %150 : vector<2x16xf32> to vector<2x16x1xf32>
    %c0_45 = arith.constant 0 : index
    %c0_46 = arith.constant 0 : index
    %152 = vector.load %arg8[%c0_45, %c0_46] : memref<16x1xf32, #tpu.memory_space<vmem>>, vector<16x1xf32>
    %153 = vector.shape_cast %152 : vector<16x1xf32> to vector<1x16x1xf32>
    %154 = vector.broadcast %153 : vector<1x16x1xf32> to vector<2x16x1xf32>
    %155 = arith.addf %151, %154 : vector<2x16x1xf32>
    %cst_47 = arith.constant 0.166666672 : f32
    %156 = vector.broadcast %cst_47 : f32 to vector<2x16x1xf32>
    %157 = arith.mulf %155, %156 : vector<2x16x1xf32>
    %cst_48 = arith.constant 5.000000e-01 : f32
    %158 = vector.broadcast %cst_48 : f32 to vector<2x16x1xf32>
    %159 = arith.addf %157, %158 : vector<2x16x1xf32>
    %cst_49 = arith.constant 0.000000e+00 : f32
    %cst_50 = arith.constant 1.000000e+00 : f32
    %160 = vector.broadcast %cst_49 : f32 to vector<2x16x1xf32>
    %161 = arith.maximumf %160, %159 : vector<2x16x1xf32>
    %162 = vector.broadcast %cst_50 : f32 to vector<2x16x1xf32>
    %163 = arith.minimumf %162, %161 : vector<2x16x1xf32>
    %164 = vector.broadcast %163 : vector<2x16x1xf32> to vector<2x16x256xf32>
    %165 = arith.mulf %127, %164 : vector<2x16x256xf32>
    %c0_51 = arith.constant 0 : index
    %c0_52 = arith.constant 0 : index
    %166 = vector.load %arg9[%c0_51, %c0_52] : memref<8x16xf32, #tpu.memory_space<vmem>>, vector<8x16xf32>
    %167 = vector.extract_strided_slice %165 {offsets = [0, 0, 0], sizes = [2, 1, 256], strides = [1, 1, 1]} : vector<2x16x256xf32> to vector<2x1x256xf32>
    %168 = vector.extract_strided_slice %166 {offsets = [0, 0], sizes = [8, 1], strides = [1, 1]} : vector<8x16xf32> to vector<8x1xf32>
    %169 = vector.shape_cast %168 : vector<8x1xf32> to vector<1x8x1xf32>
    %170 = vector.broadcast %167 : vector<2x1x256xf32> to vector<2x8x256xf32>
    %171 = vector.broadcast %169 : vector<1x8x1xf32> to vector<2x8x256xf32>
    %172 = arith.mulf %170, %171 : vector<2x8x256xf32>
    %173 = vector.extract_strided_slice %165 {offsets = [0, 1, 0], sizes = [2, 1, 256], strides = [1, 1, 1]} : vector<2x16x256xf32> to vector<2x1x256xf32>
    %174 = vector.extract_strided_slice %166 {offsets = [0, 1], sizes = [8, 1], strides = [1, 1]} : vector<8x16xf32> to vector<8x1xf32>
    %175 = vector.shape_cast %174 : vector<8x1xf32> to vector<1x8x1xf32>
    %176 = vector.broadcast %173 : vector<2x1x256xf32> to vector<2x8x256xf32>
    %177 = vector.broadcast %175 : vector<1x8x1xf32> to vector<2x8x256xf32>
    %178 = arith.mulf %176, %177 : vector<2x8x256xf32>
    %179 = arith.addf %172, %178 : vector<2x8x256xf32>
    %180 = vector.extract_strided_slice %165 {offsets = [0, 2, 0], sizes = [2, 1, 256], strides = [1, 1, 1]} : vector<2x16x256xf32> to vector<2x1x256xf32>
    %181 = vector.extract_strided_slice %166 {offsets = [0, 2], sizes = [8, 1], strides = [1, 1]} : vector<8x16xf32> to vector<8x1xf32>
    %182 = vector.shape_cast %181 : vector<8x1xf32> to vector<1x8x1xf32>
    %183 = vector.broadcast %180 : vector<2x1x256xf32> to vector<2x8x256xf32>
    %184 = vector.broadcast %182 : vector<1x8x1xf32> to vector<2x8x256xf32>
    %185 = arith.mulf %183, %184 : vector<2x8x256xf32>
    %186 = arith.addf %179, %185 : vector<2x8x256xf32>
    %187 = vector.extract_strided_slice %165 {offsets = [0, 3, 0], sizes = [2, 1, 256], strides = [1, 1, 1]} : vector<2x16x256xf32> to vector<2x1x256xf32>
    %188 = vector.extract_strided_slice %166 {offsets = [0, 3], sizes = [8, 1], strides = [1, 1]} : vector<8x16xf32> to vector<8x1xf32>
    %189 = vector.shape_cast %188 : vector<8x1xf32> to vector<1x8x1xf32>
    %190 = vector.broadcast %187 : vector<2x1x256xf32> to vector<2x8x256xf32>
    %191 = vector.broadcast %189 : vector<1x8x1xf32> to vector<2x8x256xf32>
    %192 = arith.mulf %190, %191 : vector<2x8x256xf32>
    %193 = arith.addf %186, %192 : vector<2x8x256xf32>
    %194 = vector.extract_strided_slice %165 {offsets = [0, 4, 0], sizes = [2, 1, 256], strides = [1, 1, 1]} : vector<2x16x256xf32> to vector<2x1x256xf32>
    %195 = vector.extract_strided_slice %166 {offsets = [0, 4], sizes = [8, 1], strides = [1, 1]} : vector<8x16xf32> to vector<8x1xf32>
    %196 = vector.shape_cast %195 : vector<8x1xf32> to vector<1x8x1xf32>
    %197 = vector.broadcast %194 : vector<2x1x256xf32> to vector<2x8x256xf32>
    %198 = vector.broadcast %196 : vector<1x8x1xf32> to vector<2x8x256xf32>
    %199 = arith.mulf %197, %198 : vector<2x8x256xf32>
    %200 = arith.addf %193, %199 : vector<2x8x256xf32>
    %201 = vector.extract_strided_slice %165 {offsets = [0, 5, 0], sizes = [2, 1, 256], strides = [1, 1, 1]} : vector<2x16x256xf32> to vector<2x1x256xf32>
    %202 = vector.extract_strided_slice %166 {offsets = [0, 5], sizes = [8, 1], strides = [1, 1]} : vector<8x16xf32> to vector<8x1xf32>
    %203 = vector.shape_cast %202 : vector<8x1xf32> to vector<1x8x1xf32>
    %204 = vector.broadcast %201 : vector<2x1x256xf32> to vector<2x8x256xf32>
    %205 = vector.broadcast %203 : vector<1x8x1xf32> to vector<2x8x256xf32>
    %206 = arith.mulf %204, %205 : vector<2x8x256xf32>
    %207 = arith.addf %200, %206 : vector<2x8x256xf32>
    %208 = vector.extract_strided_slice %165 {offsets = [0, 6, 0], sizes = [2, 1, 256], strides = [1, 1, 1]} : vector<2x16x256xf32> to vector<2x1x256xf32>
    %209 = vector.extract_strided_slice %166 {offsets = [0, 6], sizes = [8, 1], strides = [1, 1]} : vector<8x16xf32> to vector<8x1xf32>
    %210 = vector.shape_cast %209 : vector<8x1xf32> to vector<1x8x1xf32>
    %211 = vector.broadcast %208 : vector<2x1x256xf32> to vector<2x8x256xf32>
    %212 = vector.broadcast %210 : vector<1x8x1xf32> to vector<2x8x256xf32>
    %213 = arith.mulf %211, %212 : vector<2x8x256xf32>
    %214 = arith.addf %207, %213 : vector<2x8x256xf32>
    %215 = vector.extract_strided_slice %165 {offsets = [0, 7, 0], sizes = [2, 1, 256], strides = [1, 1, 1]} : vector<2x16x256xf32> to vector<2x1x256xf32>
    %216 = vector.extract_strided_slice %166 {offsets = [0, 7], sizes = [8, 1], strides = [1, 1]} : vector<8x16xf32> to vector<8x1xf32>
    %217 = vector.shape_cast %216 : vector<8x1xf32> to vector<1x8x1xf32>
    %218 = vector.broadcast %215 : vector<2x1x256xf32> to vector<2x8x256xf32>
    %219 = vector.broadcast %217 : vector<1x8x1xf32> to vector<2x8x256xf32>
    %220 = arith.mulf %218, %219 : vector<2x8x256xf32>
    %221 = arith.addf %214, %220 : vector<2x8x256xf32>
    %222 = vector.extract_strided_slice %165 {offsets = [0, 8, 0], sizes = [2, 1, 256], strides = [1, 1, 1]} : vector<2x16x256xf32> to vector<2x1x256xf32>
    %223 = vector.extract_strided_slice %166 {offsets = [0, 8], sizes = [8, 1], strides = [1, 1]} : vector<8x16xf32> to vector<8x1xf32>
    %224 = vector.shape_cast %223 : vector<8x1xf32> to vector<1x8x1xf32>
    %225 = vector.broadcast %222 : vector<2x1x256xf32> to vector<2x8x256xf32>
    %226 = vector.broadcast %224 : vector<1x8x1xf32> to vector<2x8x256xf32>
    %227 = arith.mulf %225, %226 : vector<2x8x256xf32>
    %228 = arith.addf %221, %227 : vector<2x8x256xf32>
    %229 = vector.extract_strided_slice %165 {offsets = [0, 9, 0], sizes = [2, 1, 256], strides = [1, 1, 1]} : vector<2x16x256xf32> to vector<2x1x256xf32>
    %230 = vector.extract_strided_slice %166 {offsets = [0, 9], sizes = [8, 1], strides = [1, 1]} : vector<8x16xf32> to vector<8x1xf32>
    %231 = vector.shape_cast %230 : vector<8x1xf32> to vector<1x8x1xf32>
    %232 = vector.broadcast %229 : vector<2x1x256xf32> to vector<2x8x256xf32>
    %233 = vector.broadcast %231 : vector<1x8x1xf32> to vector<2x8x256xf32>
    %234 = arith.mulf %232, %233 : vector<2x8x256xf32>
    %235 = arith.addf %228, %234 : vector<2x8x256xf32>
    %236 = vector.extract_strided_slice %165 {offsets = [0, 10, 0], sizes = [2, 1, 256], strides = [1, 1, 1]} : vector<2x16x256xf32> to vector<2x1x256xf32>
    %237 = vector.extract_strided_slice %166 {offsets = [0, 10], sizes = [8, 1], strides = [1, 1]} : vector<8x16xf32> to vector<8x1xf32>
    %238 = vector.shape_cast %237 : vector<8x1xf32> to vector<1x8x1xf32>
    %239 = vector.broadcast %236 : vector<2x1x256xf32> to vector<2x8x256xf32>
    %240 = vector.broadcast %238 : vector<1x8x1xf32> to vector<2x8x256xf32>
    %241 = arith.mulf %239, %240 : vector<2x8x256xf32>
    %242 = arith.addf %235, %241 : vector<2x8x256xf32>
    %243 = vector.extract_strided_slice %165 {offsets = [0, 11, 0], sizes = [2, 1, 256], strides = [1, 1, 1]} : vector<2x16x256xf32> to vector<2x1x256xf32>
    %244 = vector.extract_strided_slice %166 {offsets = [0, 11], sizes = [8, 1], strides = [1, 1]} : vector<8x16xf32> to vector<8x1xf32>
    %245 = vector.shape_cast %244 : vector<8x1xf32> to vector<1x8x1xf32>
    %246 = vector.broadcast %243 : vector<2x1x256xf32> to vector<2x8x256xf32>
    %247 = vector.broadcast %245 : vector<1x8x1xf32> to vector<2x8x256xf32>
    %248 = arith.mulf %246, %247 : vector<2x8x256xf32>
    %249 = arith.addf %242, %248 : vector<2x8x256xf32>
    %250 = vector.extract_strided_slice %165 {offsets = [0, 12, 0], sizes = [2, 1, 256], strides = [1, 1, 1]} : vector<2x16x256xf32> to vector<2x1x256xf32>
    %251 = vector.extract_strided_slice %166 {offsets = [0, 12], sizes = [8, 1], strides = [1, 1]} : vector<8x16xf32> to vector<8x1xf32>
    %252 = vector.shape_cast %251 : vector<8x1xf32> to vector<1x8x1xf32>
    %253 = vector.broadcast %250 : vector<2x1x256xf32> to vector<2x8x256xf32>
    %254 = vector.broadcast %252 : vector<1x8x1xf32> to vector<2x8x256xf32>
    %255 = arith.mulf %253, %254 : vector<2x8x256xf32>
    %256 = arith.addf %249, %255 : vector<2x8x256xf32>
    %257 = vector.extract_strided_slice %165 {offsets = [0, 13, 0], sizes = [2, 1, 256], strides = [1, 1, 1]} : vector<2x16x256xf32> to vector<2x1x256xf32>
    %258 = vector.extract_strided_slice %166 {offsets = [0, 13], sizes = [8, 1], strides = [1, 1]} : vector<8x16xf32> to vector<8x1xf32>
    %259 = vector.shape_cast %258 : vector<8x1xf32> to vector<1x8x1xf32>
    %260 = vector.broadcast %257 : vector<2x1x256xf32> to vector<2x8x256xf32>
    %261 = vector.broadcast %259 : vector<1x8x1xf32> to vector<2x8x256xf32>
    %262 = arith.mulf %260, %261 : vector<2x8x256xf32>
    %263 = arith.addf %256, %262 : vector<2x8x256xf32>
    %264 = vector.extract_strided_slice %165 {offsets = [0, 14, 0], sizes = [2, 1, 256], strides = [1, 1, 1]} : vector<2x16x256xf32> to vector<2x1x256xf32>
    %265 = vector.extract_strided_slice %166 {offsets = [0, 14], sizes = [8, 1], strides = [1, 1]} : vector<8x16xf32> to vector<8x1xf32>
    %266 = vector.shape_cast %265 : vector<8x1xf32> to vector<1x8x1xf32>
    %267 = vector.broadcast %264 : vector<2x1x256xf32> to vector<2x8x256xf32>
    %268 = vector.broadcast %266 : vector<1x8x1xf32> to vector<2x8x256xf32>
    %269 = arith.mulf %267, %268 : vector<2x8x256xf32>
    %270 = arith.addf %263, %269 : vector<2x8x256xf32>
    %271 = vector.extract_strided_slice %165 {offsets = [0, 15, 0], sizes = [2, 1, 256], strides = [1, 1, 1]} : vector<2x16x256xf32> to vector<2x1x256xf32>
    %272 = vector.extract_strided_slice %166 {offsets = [0, 15], sizes = [8, 1], strides = [1, 1]} : vector<8x16xf32> to vector<8x1xf32>
    %273 = vector.shape_cast %272 : vector<8x1xf32> to vector<1x8x1xf32>
    %274 = vector.broadcast %271 : vector<2x1x256xf32> to vector<2x8x256xf32>
    %275 = vector.broadcast %273 : vector<1x8x1xf32> to vector<2x8x256xf32>
    %276 = arith.mulf %274, %275 : vector<2x8x256xf32>
    %277 = arith.addf %270, %276 : vector<2x8x256xf32>
    %c0_53 = arith.constant 0 : index
    %c0_54 = arith.constant 0 : index
    %278 = vector.load %arg10[%c0_53, %c0_54] : memref<8x1xf32, #tpu.memory_space<vmem>>, vector<8x1xf32>
    %279 = vector.shape_cast %278 : vector<8x1xf32> to vector<1x8x1xf32>
    %280 = vector.broadcast %279 : vector<1x8x1xf32> to vector<2x8x256xf32>
    %281 = arith.addf %277, %280 : vector<2x8x256xf32>
    %282 = arith.addf %281, %0 : vector<2x8x256xf32>
    %c0_55 = arith.constant 0 : index
    %c0_56 = arith.constant 0 : index
    %c0_57 = arith.constant 0 : index
    %283 = vector.load %arg11[%c0_55, %c0_56, %c0_57] : memref<2x8x256xf32, #tpu.memory_space<vmem>>, vector<2x8x256xf32>
    tpu.vector_store %arg11[%c0_55, %c0_56, %c0_57], %282 {strides = array<i32>} : memref<2x8x256xf32, #tpu.memory_space<vmem>>, vector<2x8x256xf32>,
    return
  }
}

</mosaic_0001>

<llo_original>
// kernel: tpu_custom_call.1
$region0: #{tpu_custom_call.1}
  #allocation0 [shape = 'u32[]', space=smem, size = 0x4, offset = 0x4, fixed_abs, tag = 'smem constant byte address 0x4 - core index']
  #allocation1 [shape = 'u32[72,128]{1,0:T(1,128)}', space=vmem, size = 0x9000, scoped, tag = 'internal scratch']
  %s0 = inlined_call_operand.vmem [shape: f32[2,8,256], index: 0, kind: input, shape index: {}]
  %s1 = inlined_call_operand.vmem [shape: f32[16,8], index: 1, kind: input, shape index: {}]
  %s2 = inlined_call_operand.vmem [shape: f32[16,1], index: 2, kind: input, shape index: {}]
  %s3 = inlined_call_operand.hbm [shape: f32[9,32,256], index: 3, kind: input, shape index: {}]
  %s4 = inlined_call_operand.vmem [shape: f32[16,1], index: 4, kind: input, shape index: {}]
  %s5 = inlined_call_operand.vmem [shape: f32[16,4], index: 5, kind: input, shape index: {}]
  %s6 = inlined_call_operand.vmem [shape: f32[1,4], index: 6, kind: input, shape index: {}]
  %s7 = inlined_call_operand.vmem [shape: f32[16,4], index: 7, kind: input, shape index: {}]
  %s8 = inlined_call_operand.vmem [shape: f32[16,1], index: 8, kind: input, shape index: {}]
  %s9 = inlined_call_operand.vmem [shape: f32[8,16], index: 9, kind: input, shape index: {}]
  %s10 = inlined_call_operand.vmem [shape: f32[8,1], index: 10, kind: input, shape index: {}]
  %s11 = inlined_call_operand.hbm [shape: f32[2,8,256], index: 11, kind: output, shape index: {}]
  %s12 = sld [smem:[#allocation0]]
  $region58: #{tpu_custom_call.1} parent=0
    _
  %s14 = ssub.s32 1, %s12
  %s15 = scalar_select 0, %s14, %s12
  $region1: #{tpu_custom_call.1} parent=0
    #allocation2 [shape = 'u8[294912]{0}', space=vmem, size = 0x48000, scoped, tag = 'input window, operand 3, single buffered']
    #allocation3 [shape = 's32[1]{0}', space=sflag, size = 0x4, scoped, tag = 'scoped memory for tpu_custom_call.1']
    #allocation4 [shape = 's32[1]{0}', space=sflag, size = 0x4, scoped, tag = 'scoped memory for tpu_custom_call.1']
    #allocation5 [shape = 'u8[16384]{0}', space=vmem, size = 0x4000, scoped, tag = 'output window, operand 0, single buffered']
    %16 = vsyncpa [#allocation3], 0
    %17 = vsyncpa [#allocation4], 0
    // Predicated region
    $region2: #{tpu_custom_call.1} parent=1 // pred_check
      _
    $region3: #{tpu_custom_call.1} parent=1 // pred_check_branch
      %19 = sbr.rel (0) target = $region5
    $region4: #{tpu_custom_call.1} parent=1 // pred_region
      _
    $region5: #{tpu_custom_call.1} parent=1 // pred_fallthru
      _
    // Predicated region
    $region6: #{tpu_custom_call.1} parent=1 // pred_check
      _
    $region7: #{tpu_custom_call.1} parent=1 // pred_check_branch
      %21 = sbr.rel (0) target = $region9
    $region8: #{tpu_custom_call.1} parent=1 // pred_region
      _
    $region9: #{tpu_custom_call.1} parent=1 // pred_fallthru
      _
    // Predicated region
    $region10: #{tpu_custom_call.1} parent=1 // pred_check
      _
    $region11: #{tpu_custom_call.1} parent=1 // pred_check_branch
      %23 = sbr.rel (0) target = $region13
    $region12: #{tpu_custom_call.1} parent=1 // pred_region
      _
    $region13: #{tpu_custom_call.1} parent=1 // pred_fallthru
      _
    // Predicated region
    $region14: #{tpu_custom_call.1} parent=1 // pred_check
      _
    $region15: #{tpu_custom_call.1} parent=1 // pred_check_branch
      %25 = sbr.rel (0) target = $region17
    $region16: #{tpu_custom_call.1} parent=1 // pred_region
      %27 = vsyncadd [#allocation3], 0
      %s28 = sshll.u32 %s3, 4
      %s29 = int_to_ptr.hbm [resolvable:$true] %s28
      %s30 = sshll.u32 [#allocation2], 4
      %s31 = int_to_ptr.vmem [resolvable:$true] %s30
      %36 = dma.hbm_to_vmem [thread:$0]  %s29, 9216, %s31, [#allocation3], 256, 256, 16
    $region17: #{tpu_custom_call.1} parent=1 // pred_fallthru
      _
    // Predicated region
    $region18: #{tpu_custom_call.1} parent=1 // pred_check
      _
    $region19: #{tpu_custom_call.1} parent=1 // pred_check_branch
      %38 = sbr.rel (0) target = $region21
    $region20: #{tpu_custom_call.1} parent=1 // pred_region
      _
    $region21: #{tpu_custom_call.1} parent=1 // pred_fallthru
      _
    // Predicated region
    $region22: #{tpu_custom_call.1} parent=1 // pred_check
      _
    $region23: #{tpu_custom_call.1} parent=1 // pred_check_branch
      %40 = sbr.rel (0) target = $region25
    $region24: #{tpu_custom_call.1} parent=1 // pred_region
      _
    $region25: #{tpu_custom_call.1} parent=1 // pred_fallthru
      _
    // Predicated region
    $region26: #{tpu_custom_call.1} parent=1 // pred_check
      _
    $region27: #{tpu_custom_call.1} parent=1 // pred_check_branch
      %42 = sbr.rel (0) target = $region29
    $region28: #{tpu_custom_call.1} parent=1 // pred_region
      _
    $region29: #{tpu_custom_call.1} parent=1 // pred_fallthru
      _
    // Predicated region
    $region30: #{tpu_custom_call.1} parent=1 // pred_check
      _
    $region31: #{tpu_custom_call.1} parent=1 // pred_check_branch
      %44 = sbr.rel (0) target = $region33
    $region32: #{tpu_custom_call.1} parent=1 // pred_region
      _
    $region33: #{tpu_custom_call.1} parent=1 // pred_fallthru
      _
    // Predicated region
    $region34: #{tpu_custom_call.1} parent=1 // pred_check
      _
    $region35: #{tpu_custom_call.1} parent=1 // pred_check_branch
      %46 = sbr.rel (0) target = $region37
    $region36: #{tpu_custom_call.1} parent=1 // pred_region
      _
    $region37: #{tpu_custom_call.1} parent=1 // pred_fallthru
      _
    // Predicated region
    $region38: #{tpu_custom_call.1} parent=1 // pred_check
      _
    $region39: #{tpu_custom_call.1} parent=1 // pred_check_branch
      %48 = sbr.rel (0) target = $region41
    $region40: #{tpu_custom_call.1} parent=1 // pred_region
      _
    $region41: #{tpu_custom_call.1} parent=1 // pred_fallthru
      _
    // Predicated region
    $region42: #{tpu_custom_call.1} parent=1 // pred_check
      _
    $region43: #{tpu_custom_call.1} parent=1 // pred_check_branch
      %50 = sbr.rel (0) target = $region45
    $region44: #{tpu_custom_call.1} parent=1 // pred_region
      _
    $region45: #{tpu_custom_call.1} parent=1 // pred_fallthru
      _
    // Predicated region
    $region46: #{tpu_custom_call.1} parent=1 // pred_check
      _
    $region47: #{tpu_custom_call.1} parent=1 // pred_check_branch
      %52 = sbr.rel (0) target = $region49
    $region48: #{tpu_custom_call.1} parent=1 // pred_region
      %54 = dma.done [#allocation3], 9216
    $region49: #{tpu_custom_call.1} parent=1 // pred_fallthru
      _
    %v55 = vld [vmem:[%s0] sm:$0xff]
    %v56 = vld [vmem:[%s0 + $0x8] sm:$0xff]
    %v57 = vld [vmem:[%s0 + $0x10] sm:$0xff]
    %v58 = vld [vmem:[%s0 + $0x18] sm:$0xff]
    %v59 = vld [vmem:[%s1] sm:$0xff]
    %v60 = vld [vmem:[%s1 + $0x8] sm:$0xff]
    %v61 = vperm.slane %v55, 0
    %v62 = vperm.slane %v56, 0
    %v63 = vperm.slane %v57, 0
    %v64 = vperm.slane %v58, 0
    %66 = vset.pattern.permute.xlu0 0
    %67 = vperm.xlu0 %66, %v59
    %v68 = vpop.permute.xlu0 %67
    %71 = vset.pattern.permute.xlu0 0
    %72 = vperm.xlu0 %71, %v60
    %v73 = vpop.permute.xlu0 %72
    %v75 = vmul.f32 %v61, %v68
    %v76 = vmul.f32 %v62, %v68
    %v77 = vmul.f32 %v61, %v73
    %v78 = vmul.f32 %v62, %v73
    %v79 = vmul.f32 %v63, %v68
    %v80 = vmul.f32 %v64, %v68
    %v81 = vmul.f32 %v63, %v73
    %v82 = vmul.f32 %v64, %v73
    %v83 = vperm.slane %v55, 1
    %v84 = vperm.slane %v56, 1
    %v85 = vperm.slane %v57, 1
    %v86 = vperm.slane %v58, 1
    %87 = vset.pattern.permute.xlu0 1
    %88 = vperm.xlu0 %87, %v59
    %v89 = vpop.permute.xlu0 %88
    %91 = vset.pattern.permute.xlu0 1
    %92 = vperm.xlu0 %91, %v60
    %v93 = vpop.permute.xlu0 %92
    %v95 = vmul.f32 %v83, %v89
    %v96 = vmul.f32 %v84, %v89
    %v97 = vmul.f32 %v83, %v93
    %v98 = vmul.f32 %v84, %v93
    %v99 = vmul.f32 %v85, %v89
    %v100 = vmul.f32 %v86, %v89
    %v101 = vmul.f32 %v85, %v93
    %v102 = vmul.f32 %v86, %v93
    %v103 = vadd.f32 %v75, %v95
    %v104 = vadd.f32 %v76, %v96
    %v105 = vadd.f32 %v77, %v97
    %v106 = vadd.f32 %v78, %v98
    %v107 = vadd.f32 %v79, %v99
    %v108 = vadd.f32 %v80, %v100
    %v109 = vadd.f32 %v81, %v101
    %v110 = vadd.f32 %v82, %v102
    %v111 = vperm.slane %v55, 2
    %v112 = vperm.slane %v56, 2
    %v113 = vperm.slane %v57, 2
    %v114 = vperm.slane %v58, 2
    %115 = vset.pattern.permute.xlu0 2
    %116 = vperm.xlu0 %115, %v59
    %v117 = vpop.permute.xlu0 %116
    %119 = vset.pattern.permute.xlu0 2
    %120 = vperm.xlu0 %119, %v60
    %v121 = vpop.permute.xlu0 %120
    %v123 = vmul.f32 %v111, %v117
    %v124 = vmul.f32 %v112, %v117
    %v125 = vmul.f32 %v111, %v121
    %v126 = vmul.f32 %v112, %v121
    %v127 = vmul.f32 %v113, %v117
    %v128 = vmul.f32 %v114, %v117
    %v129 = vmul.f32 %v113, %v121
    %v130 = vmul.f32 %v114, %v121
    %v131 = vadd.f32 %v103, %v123
    %v132 = vadd.f32 %v104, %v124
    %v133 = vadd.f32 %v105, %v125
    %v134 = vadd.f32 %v106, %v126
    %v135 = vadd.f32 %v107, %v127
    %v136 = vadd.f32 %v108, %v128
    %v137 = vadd.f32 %v109, %v129
    %v138 = vadd.f32 %v110, %v130
    %v139 = vperm.slane %v55, 3
    %v140 = vperm.slane %v56, 3
    %v141 = vperm.slane %v57, 3
    %v142 = vperm.slane %v58, 3
    %143 = vset.pattern.permute.xlu0 3
    %144 = vperm.xlu0 %143, %v59
    %v145 = vpop.permute.xlu0 %144
    %147 = vset.pattern.permute.xlu0 3
    %148 = vperm.xlu0 %147, %v60
    %v149 = vpop.permute.xlu0 %148
    %v151 = vmul.f32 %v139, %v145
    %v152 = vmul.f32 %v140, %v145
    %v153 = vmul.f32 %v139, %v149
    %v154 = vmul.f32 %v140, %v149
    %v155 = vmul.f32 %v141, %v145
    %v156 = vmul.f32 %v142, %v145
    %v157 = vmul.f32 %v141, %v149
    %v158 = vmul.f32 %v142, %v149
    %v159 = vadd.f32 %v131, %v151
    %v160 = vadd.f32 %v132, %v152
    %v161 = vadd.f32 %v133, %v153
    %v162 = vadd.f32 %v134, %v154
    %v163 = vadd.f32 %v135, %v155
    %v164 = vadd.f32 %v136, %v156
    %v165 = vadd.f32 %v137, %v157
    %v166 = vadd.f32 %v138, %v158
    %v167 = vperm.slane %v55, 4
    %v168 = vperm.slane %v56, 4
    %v169 = vperm.slane %v57, 4
    %v170 = vperm.slane %v58, 4
    %171 = vset.pattern.permute.xlu0 4
    %172 = vperm.xlu0 %171, %v59
    %v173 = vpop.permute.xlu0 %172
    %175 = vset.pattern.permute.xlu0 4
    %176 = vperm.xlu0 %175, %v60
    %v177 = vpop.permute.xlu0 %176
    %v179 = vmul.f32 %v167, %v173
    %v180 = vmul.f32 %v168, %v173
    %v181 = vmul.f32 %v167, %v177
    %v182 = vmul.f32 %v168, %v177
    %v183 = vmul.f32 %v169, %v173
    %v184 = vmul.f32 %v170, %v173
    %v185 = vmul.f32 %v169, %v177
    %v186 = vmul.f32 %v170, %v177
    %v187 = vadd.f32 %v159, %v179
    %v188 = vadd.f32 %v160, %v180
    %v189 = vadd.f32 %v161, %v181
    %v190 = vadd.f32 %v162, %v182
    %v191 = vadd.f32 %v163, %v183
    %v192 = vadd.f32 %v164, %v184
    %v193 = vadd.f32 %v165, %v185
    %v194 = vadd.f32 %v166, %v186
    %v195 = vperm.slane %v55, 5
    %v196 = vperm.slane %v56, 5
    %v197 = vperm.slane %v57, 5
    %v198 = vperm.slane %v58, 5
    %199 = vset.pattern.permute.xlu0 5
    %200 = vperm.xlu0 %199, %v59
    %v201 = vpop.permute.xlu0 %200
    %203 = vset.pattern.permute.xlu0 5
    %204 = vperm.xlu0 %203, %v60
    %v205 = vpop.permute.xlu0 %204
    %v207 = vmul.f32 %v195, %v201
    %v208 = vmul.f32 %v196, %v201
    %v209 = vmul.f32 %v195, %v205
    %v210 = vmul.f32 %v196, %v205
    %v211 = vmul.f32 %v197, %v201
    %v212 = vmul.f32 %v198, %v201
    %v213 = vmul.f32 %v197, %v205
    %v214 = vmul.f32 %v198, %v205
    %v215 = vadd.f32 %v187, %v207
    %v216 = vadd.f32 %v188, %v208
    %v217 = vadd.f32 %v189, %v209
    %v218 = vadd.f32 %v190, %v210
    %v219 = vadd.f32 %v191, %v211
    %v220 = vadd.f32 %v192, %v212
    %v221 = vadd.f32 %v193, %v213
    %v222 = vadd.f32 %v194, %v214
    %v223 = vperm.slane %v55, 6
    %v224 = vperm.slane %v56, 6
    %v225 = vperm.slane %v57, 6
    %v226 = vperm.slane %v58, 6
    %227 = vset.pattern.permute.xlu0 6
    %228 = vperm.xlu0 %227, %v59
    %v229 = vpop.permute.xlu0 %228
    %231 = vset.pattern.permute.xlu0 6
    %232 = vperm.xlu0 %231, %v60
    %v233 = vpop.permute.xlu0 %232
    %v235 = vmul.f32 %v223, %v229
    %v236 = vmul.f32 %v224, %v229
    %v237 = vmul.f32 %v223, %v233
    %v238 = vmul.f32 %v224, %v233
    %v239 = vmul.f32 %v225, %v229
    %v240 = vmul.f32 %v226, %v229
    %v241 = vmul.f32 %v225, %v233
    %v242 = vmul.f32 %v226, %v233
    %v243 = vadd.f32 %v215, %v235
    %v244 = vadd.f32 %v216, %v236
    %v245 = vadd.f32 %v217, %v237
    %v246 = vadd.f32 %v218, %v238
    %v247 = vadd.f32 %v219, %v239
    %v248 = vadd.f32 %v220, %v240
    %v249 = vadd.f32 %v221, %v241
    %v250 = vadd.f32 %v222, %v242
    %v251 = vperm.slane %v55, 7
    %v252 = vperm.slane %v56, 7
    %v253 = vperm.slane %v57, 7
    %v254 = vperm.slane %v58, 7
    %255 = vset.pattern.permute.xlu0 7
    %256 = vperm.xlu0 %255, %v59
    %v257 = vpop.permute.xlu0 %256
    %259 = vset.pattern.permute.xlu0 7
    %260 = vperm.xlu0 %259, %v60
    %v261 = vpop.permute.xlu0 %260
    %v263 = vmul.f32 %v251, %v257
    %v264 = vmul.f32 %v252, %v257
    %v265 = vmul.f32 %v251, %v261
    %v266 = vmul.f32 %v252, %v261
    %v267 = vmul.f32 %v253, %v257
    %v268 = vmul.f32 %v254, %v257
    %v269 = vmul.f32 %v253, %v261
    %v270 = vmul.f32 %v254, %v261
    %v271 = vadd.f32 %v243, %v263
    %v272 = vadd.f32 %v244, %v264
    %v273 = vadd.f32 %v245, %v265
    %v274 = vadd.f32 %v246, %v266
    %v275 = vadd.f32 %v247, %v267
    %v276 = vadd.f32 %v248, %v268
    %v277 = vadd.f32 %v249, %v269
    %v278 = vadd.f32 %v250, %v270
    %v279 = vld [vmem:[%s2] sm:$0xff]
    %v280 = vld [vmem:[%s2 + $0x8] sm:$0xff]
    %282 = vset.pattern.permute.xlu0 0
    %283 = vperm.xlu0 %282, %v279
    %v284 = vpop.permute.xlu0 %283
    %287 = vset.pattern.permute.xlu0 0
    %288 = vperm.xlu0 %287, %v280
    %v289 = vpop.permute.xlu0 %288
    %v291 = vadd.f32 %v271, %v284
    %v292 = vadd.f32 %v272, %v284
    %v293 = vadd.f32 %v273, %v289
    %v294 = vadd.f32 %v274, %v289
    %v295 = vadd.f32 %v275, %v284
    %v296 = vadd.f32 %v276, %v284
    %v297 = vadd.f32 %v277, %v289
    %v298 = vadd.f32 %v278, %v289
    %v299 = vrcp.pop 6.0
    %v300 = vmul.f32 6.0, %v299
    %v301 = vsub.f32 1.0, %v300
    %v302 = vmul.f32 %v299, %v301
    %v303 = vadd.f32 %v299, %v302
    %vm304 = vweird.f32 %v299
    %v305 = vsel %vm304, %v299, %v303
    %v306 = vmul.f32 %v291, %v305
    %v307 = vmul.f32 %v292, %v305
    %v308 = vmul.f32 %v293, %v305
    %v309 = vmul.f32 %v294, %v305
    %v310 = vmul.f32 %v295, %v305
    %v311 = vmul.f32 %v296, %v305
    %v312 = vmul.f32 %v297, %v305
    %v313 = vmul.f32 %v298, %v305
    %v314 = vadd.f32 %v306, 0.5
    %v315 = vadd.f32 %v307, 0.5
    %v316 = vadd.f32 %v308, 0.5
    %v317 = vadd.f32 %v309, 0.5
    %v318 = vadd.f32 %v310, 0.5
    %v319 = vadd.f32 %v311, 0.5
    %v320 = vadd.f32 %v312, 0.5
    %v321 = vadd.f32 %v313, 0.5
    %v322 = vmax.f32 %v314, 0.0
    %v323 = vmax.f32 %v315, 0.0
    %v324 = vmax.f32 %v316, 0.0
    %v325 = vmax.f32 %v317, 0.0
    %v326 = vmax.f32 %v318, 0.0
    %v327 = vmax.f32 %v319, 0.0
    %v328 = vmax.f32 %v320, 0.0
    %v329 = vmax.f32 %v321, 0.0
    %v330 = vmin.f32 %v322, 1.0
    %v331 = vmin.f32 %v323, 1.0
    %v332 = vmin.f32 %v324, 1.0
    %v333 = vmin.f32 %v325, 1.0
    %v334 = vmin.f32 %v326, 1.0
    %v335 = vmin.f32 %v327, 1.0
    %v336 = vmin.f32 %v328, 1.0
    %v337 = vmin.f32 %v329, 1.0
    %v338 = vmul.f32 %v291, %v330
    %v339 = vmul.f32 %v292, %v331
    %v340 = vmul.f32 %v293, %v332
    %v341 = vmul.f32 %v294, %v333
    %v342 = vmul.f32 %v295, %v334
    %v343 = vmul.f32 %v296, %v335
    %v344 = vmul.f32 %v297, %v336
    %v345 = vmul.f32 %v298, %v337
    %s346 = scalar_lea.vmem [#allocation2], 256
    %v347 = vld [vmem:[%s346] sm:$0xff]
    %v348 = vld [vmem:[%s346 + $0x8] sm:$0xff]
    %v349 = vld [vmem:[%s346 + $0x10] sm:$0xff]
    %v350 = vld [vmem:[%s346 + $0x18] sm:$0xff]
    %v351 = vld [vmem:[%s346 + $0x20] sm:$0xff]
    %v352 = vld [vmem:[%s346 + $0x28] sm:$0xff]
    %v353 = vld [vmem:[%s346 + $0x30] sm:$0xff]
    %v354 = vld [vmem:[%s346 + $0x38] sm:$0xff]
    %v355 = vmul.f32 %v338, %v347
    %v356 = vmul.f32 %v339, %v348
    %v357 = vmul.f32 %v340, %v349
    %v358 = vmul.f32 %v341, %v350
    %v359 = vmul.f32 %v342, %v351
    %v360 = vmul.f32 %v343, %v352
    %v361 = vmul.f32 %v344, %v353
    %v362 = vmul.f32 %v345, %v354
    %363 = vrot.lane.b32.xlu0 %v338, 17
    %v364 = vpop.permute.xlu0 %363
    %365 = vrot.lane.b32.xlu0 %v340, 17
    %v366 = vpop.permute.xlu0 %365
    %367 = vrot.lane.b32.xlu0 %v342, 17
    %v368 = vpop.permute.xlu0 %367
    %369 = vrot.lane.b32.xlu0 %v344, 17
    %v370 = vpop.permute.xlu0 %369
    %371 = vrot.lane.b32.xlu0 %v339, 17
    %v372 = vpop.permute.xlu0 %371
    %373 = vrot.lane.b32.xlu0 %v341, 17
    %v374 = vpop.permute.xlu0 %373
    %375 = vrot.lane.b32.xlu0 %v343, 17
    %v376 = vpop.permute.xlu0 %375
    %377 = vrot.lane.b32.xlu0 %v345, 17
    %v378 = vpop.permute.xlu0 %377
    %v379 = vlaneseq
    %v380 = vand.u32 %v379, 127
    %vm381 = vcmp.lt.s32.totalorder %v380, 17
    %v382 = vsel %vm381, %v364, %v372
    %v383 = vsel %vm381, %v366, %v374
    %v384 = vsel %vm381, %v368, %v376
    %v385 = vsel %vm381, %v370, %v378
    %v386 = vsel %vm381, %v372, %v364
    %v387 = vsel %vm381, %v374, %v366
    %v388 = vsel %vm381, %v376, %v368
    %v389 = vsel %vm381, %v378, %v370
    %v390 = vld [vmem:[#allocation2] sm:$0xff]
    %v391 = vld [vmem:[#allocation2 + $0x8] sm:$0xff]
    %v392 = vld [vmem:[#allocation2 + $0x10] sm:$0xff]
    %v393 = vld [vmem:[#allocation2 + $0x18] sm:$0xff]
    %v394 = vld [vmem:[#allocation2 + $0x20] sm:$0xff]
    %v395 = vld [vmem:[#allocation2 + $0x28] sm:$0xff]
    %v396 = vld [vmem:[#allocation2 + $0x30] sm:$0xff]
    %v397 = vld [vmem:[#allocation2 + $0x38] sm:$0xff]
    %v398 = vmul.f32 %v386, %v390
    %v399 = vmul.f32 %v382, %v391
    %v400 = vmul.f32 %v387, %v392
    %v401 = vmul.f32 %v383, %v393
    %v402 = vmul.f32 %v388, %v394
    %v403 = vmul.f32 %v384, %v395
    %v404 = vmul.f32 %v389, %v396
    %v405 = vmul.f32 %v385, %v397
    %v406 = vadd.f32 %v355, %v398
    %v407 = vadd.f32 %v356, %v399
    %v408 = vadd.f32 %v357, %v400
    %v409 = vadd.f32 %v358, %v401
    %v410 = vadd.f32 %v359, %v402
    %v411 = vadd.f32 %v360, %v403
    %v412 = vadd.f32 %v361, %v404
    %v413 = vadd.f32 %v362, %v405
    %414 = vrot.lane.b32.xlu0 %v338, 16
    %v415 = vpop.permute.xlu0 %414
    %416 = vrot.lane.b32.xlu0 %v340, 16
    %v417 = vpop.permute.xlu0 %416
    %418 = vrot.lane.b32.xlu0 %v342, 16
    %v419 = vpop.permute.xlu0 %418
    %420 = vrot.lane.b32.xlu0 %v344, 16
    %v421 = vpop.permute.xlu0 %420
    %422 = vrot.lane.b32.xlu0 %v339, 16
    %v423 = vpop.permute.xlu0 %422
    %424 = vrot.lane.b32.xlu0 %v341, 16
    %v425 = vpop.permute.xlu0 %424
    %426 = vrot.lane.b32.xlu0 %v343, 16
    %v427 = vpop.permute.xlu0 %426
    %428 = vrot.lane.b32.xlu0 %v345, 16
    %v429 = vpop.permute.xlu0 %428
    %vm430 = vcmp.lt.s32.totalorder %v380, 16
    %v431 = vsel %vm430, %v415, %v423
    %v432 = vsel %vm430, %v417, %v425
    %v433 = vsel %vm430, %v419, %v427
    %v434 = vsel %vm430, %v421, %v429
    %v435 = vsel %vm430, %v423, %v415
    %v436 = vsel %vm430, %v425, %v417
    %v437 = vsel %vm430, %v427, %v419
    %v438 = vsel %vm430, %v429, %v421
    %s439 = scalar_lea.vmem [#allocation2], 64
    %v440 = vld [vmem:[%s439] sm:$0xff]
    %v441 = vld [vmem:[%s439 + $0x8] sm:$0xff]
    %v442 = vld [vmem:[%s439 + $0x10] sm:$0xff]
    %v443 = vld [vmem:[%s439 + $0x18] sm:$0xff]
    %v444 = vld [vmem:[%s439 + $0x20] sm:$0xff]
    %v445 = vld [vmem:[%s439 + $0x28] sm:$0xff]
    %v446 = vld [vmem:[%s439 + $0x30] sm:$0xff]
    %v447 = vld [vmem:[%s439 + $0x38] sm:$0xff]
    %v448 = vmul.f32 %v435, %v440
    %v449 = vmul.f32 %v431, %v441
    %v450 = vmul.f32 %v436, %v442
    %v451 = vmul.f32 %v432, %v443
    %v452 = vmul.f32 %v437, %v444
    %v453 = vmul.f32 %v433, %v445
    %v454 = vmul.f32 %v438, %v446
    %v455 = vmul.f32 %v434, %v447
    %v456 = vadd.f32 %v406, %v448
    %v457 = vadd.f32 %v407, %v449
    %v458 = vadd.f32 %v408, %v450
    %v459 = vadd.f32 %v409, %v451
    %v460 = vadd.f32 %v410, %v452
    %v461 = vadd.f32 %v411, %v453
    %v462 = vadd.f32 %v412, %v454
    %v463 = vadd.f32 %v413, %v455
    %464 = vrot.lane.b32.xlu0 %v338, 15
    %v465 = vpop.permute.xlu0 %464
    %466 = vrot.lane.b32.xlu0 %v340, 15
    %v467 = vpop.permute.xlu0 %466
    %468 = vrot.lane.b32.xlu0 %v342, 15
    %v469 = vpop.permute.xlu0 %468
    %470 = vrot.lane.b32.xlu0 %v344, 15
    %v471 = vpop.permute.xlu0 %470
    %472 = vrot.lane.b32.xlu0 %v339, 15
    %v473 = vpop.permute.xlu0 %472
    %474 = vrot.lane.b32.xlu0 %v341, 15
    %v475 = vpop.permute.xlu0 %474
    %476 = vrot.lane.b32.xlu0 %v343, 15
    %v477 = vpop.permute.xlu0 %476
    %478 = vrot.lane.b32.xlu0 %v345, 15
    %v479 = vpop.permute.xlu0 %478
    %vm480 = vcmp.lt.s32.totalorder %v380, 15
    %v481 = vsel %vm480, %v465, %v473
    %v482 = vsel %vm480, %v467, %v475
    %v483 = vsel %vm480, %v469, %v477
    %v484 = vsel %vm480, %v471, %v479
    %v485 = vsel %vm480, %v473, %v465
    %v486 = vsel %vm480, %v475, %v467
    %v487 = vsel %vm480, %v477, %v469
    %v488 = vsel %vm480, %v479, %v471
    %s489 = scalar_lea.vmem [#allocation2], 128
    %v490 = vld [vmem:[%s489] sm:$0xff]
    %v491 = vld [vmem:[%s489 + $0x8] sm:$0xff]
    %v492 = vld [vmem:[%s489 + $0x10] sm:$0xff]
    %v493 = vld [vmem:[%s489 + $0x18] sm:$0xff]
    %v494 = vld [vmem:[%s489 + $0x20] sm:$0xff]
    %v495 = vld [vmem:[%s489 + $0x28] sm:$0xff]
    %v496 = vld [vmem:[%s489 + $0x30] sm:$0xff]
    %v497 = vld [vmem:[%s489 + $0x38] sm:$0xff]
    %v498 = vmul.f32 %v485, %v490
    %v499 = vmul.f32 %v481, %v491
    %v500 = vmul.f32 %v486, %v492
    %v501 = vmul.f32 %v482, %v493
    %v502 = vmul.f32 %v487, %v494
    %v503 = vmul.f32 %v483, %v495
    %v504 = vmul.f32 %v488, %v496
    %v505 = vmul.f32 %v484, %v497
    %v506 = vadd.f32 %v456, %v498
    %v507 = vadd.f32 %v457, %v499
    %v508 = vadd.f32 %v458, %v500
    %v509 = vadd.f32 %v459, %v501
    %v510 = vadd.f32 %v460, %v502
    %v511 = vadd.f32 %v461, %v503
    %v512 = vadd.f32 %v462, %v504
    %v513 = vadd.f32 %v463, %v505
    %514 = vrot.lane.b32.xlu0 %v338, 1
    %v515 = vpop.permute.xlu0 %514
    %516 = vrot.lane.b32.xlu0 %v340, 1
    %v517 = vpop.permute.xlu0 %516
    %518 = vrot.lane.b32.xlu0 %v342, 1
    %v519 = vpop.permute.xlu0 %518
    %520 = vrot.lane.b32.xlu0 %v344, 1
    %v521 = vpop.permute.xlu0 %520
    %522 = vrot.lane.b32.xlu0 %v339, 1
    %v523 = vpop.permute.xlu0 %522
    %524 = vrot.lane.b32.xlu0 %v341, 1
    %v525 = vpop.permute.xlu0 %524
    %526 = vrot.lane.b32.xlu0 %v343, 1
    %v527 = vpop.permute.xlu0 %526
    %528 = vrot.lane.b32.xlu0 %v345, 1
    %v529 = vpop.permute.xlu0 %528
    %vm530 = vcmp.lt.s32.totalorder %v380, 1
    %v531 = vsel %vm530, %v515, %v523
    %v532 = vsel %vm530, %v517, %v525
    %v533 = vsel %vm530, %v519, %v527
    %v534 = vsel %vm530, %v521, %v529
    %v535 = vsel %vm530, %v523, %v515
    %v536 = vsel %vm530, %v525, %v517
    %v537 = vsel %vm530, %v527, %v519
    %v538 = vsel %vm530, %v529, %v521
    %s539 = scalar_lea.vmem [#allocation2], 192
    %v540 = vld [vmem:[%s539] sm:$0xff]
    %v541 = vld [vmem:[%s539 + $0x8] sm:$0xff]
    %v542 = vld [vmem:[%s539 + $0x10] sm:$0xff]
    %v543 = vld [vmem:[%s539 + $0x18] sm:$0xff]
    %v544 = vld [vmem:[%s539 + $0x20] sm:$0xff]
    %v545 = vld [vmem:[%s539 + $0x28] sm:$0xff]
    %v546 = vld [vmem:[%s539 + $0x30] sm:$0xff]
    %v547 = vld [vmem:[%s539 + $0x38] sm:$0xff]
    %v548 = vmul.f32 %v535, %v540
    %v549 = vmul.f32 %v531, %v541
    %v550 = vmul.f32 %v536, %v542
    %v551 = vmul.f32 %v532, %v543
    %v552 = vmul.f32 %v537, %v544
    %v553 = vmul.f32 %v533, %v545
    %v554 = vmul.f32 %v538, %v546
    %v555 = vmul.f32 %v534, %v547
    %v556 = vadd.f32 %v506, %v548
    %v557 = vadd.f32 %v507, %v549
    %v558 = vadd.f32 %v508, %v550
    %v559 = vadd.f32 %v509, %v551
    %v560 = vadd.f32 %v510, %v552
    %v561 = vadd.f32 %v511, %v553
    %v562 = vadd.f32 %v512, %v554
    %v563 = vadd.f32 %v513, %v555
    %564 = vrot.lane.b32.xlu0 %v338, 127
    %v565 = vpop.permute.xlu0 %564
    %566 = vrot.lane.b32.xlu0 %v340, 127
    %v567 = vpop.permute.xlu0 %566
    %568 = vrot.lane.b32.xlu0 %v342, 127
    %v569 = vpop.permute.xlu0 %568
    %570 = vrot.lane.b32.xlu0 %v344, 127
    %v571 = vpop.permute.xlu0 %570
    %572 = vrot.lane.b32.xlu0 %v339, 127
    %v573 = vpop.permute.xlu0 %572
    %574 = vrot.lane.b32.xlu0 %v341, 127
    %v575 = vpop.permute.xlu0 %574
    %576 = vrot.lane.b32.xlu0 %v343, 127
    %v577 = vpop.permute.xlu0 %576
    %578 = vrot.lane.b32.xlu0 %v345, 127
    %v579 = vpop.permute.xlu0 %578
    %vm580 = vcmp.lt.s32.totalorder %v380, 127
    %v581 = vsel %vm580, %v565, %v573
    %v582 = vsel %vm580, %v567, %v575
    %v583 = vsel %vm580, %v569, %v577
    %v584 = vsel %vm580, %v571, %v579
    %v585 = vsel %vm580, %v573, %v565
    %v586 = vsel %vm580, %v575, %v567
    %v587 = vsel %vm580, %v577, %v569
    %v588 = vsel %vm580, %v579, %v571
    %s589 = scalar_lea.vmem [#allocation2], 320
    %v590 = vld [vmem:[%s589] sm:$0xff]
    %v591 = vld [vmem:[%s589 + $0x8] sm:$0xff]
    %v592 = vld [vmem:[%s589 + $0x10] sm:$0xff]
    %v593 = vld [vmem:[%s589 + $0x18] sm:$0xff]
    %v594 = vld [vmem:[%s589 + $0x20] sm:$0xff]
    %v595 = vld [vmem:[%s589 + $0x28] sm:$0xff]
    %v596 = vld [vmem:[%s589 + $0x30] sm:$0xff]
    %v597 = vld [vmem:[%s589 + $0x38] sm:$0xff]
    %v598 = vmul.f32 %v581, %v590
    %v599 = vmul.f32 %v585, %v591
    %v600 = vmul.f32 %v582, %v592
    %v601 = vmul.f32 %v586, %v593
    %v602 = vmul.f32 %v583, %v594
    %v603 = vmul.f32 %v587, %v595
    %v604 = vmul.f32 %v584, %v596
    %v605 = vmul.f32 %v588, %v597
    %v606 = vadd.f32 %v556, %v598
    %v607 = vadd.f32 %v557, %v599
    %v608 = vadd.f32 %v558, %v600
    %v609 = vadd.f32 %v559, %v601
    %v610 = vadd.f32 %v560, %v602
    %v611 = vadd.f32 %v561, %v603
    %v612 = vadd.f32 %v562, %v604
    %v613 = vadd.f32 %v563, %v605
    %614 = vrot.lane.b32.xlu0 %v338, 113
    %v615 = vpop.permute.xlu0 %614
    %616 = vrot.lane.b32.xlu0 %v340, 113
    %v617 = vpop.permute.xlu0 %616
    %618 = vrot.lane.b32.xlu0 %v342, 113
    %v619 = vpop.permute.xlu0 %618
    %620 = vrot.lane.b32.xlu0 %v344, 113
    %v621 = vpop.permute.xlu0 %620
    %622 = vrot.lane.b32.xlu0 %v339, 113
    %v623 = vpop.permute.xlu0 %622
    %624 = vrot.lane.b32.xlu0 %v341, 113
    %v625 = vpop.permute.xlu0 %624
    %626 = vrot.lane.b32.xlu0 %v343, 113
    %v627 = vpop.permute.xlu0 %626
    %628 = vrot.lane.b32.xlu0 %v345, 113
    %v629 = vpop.permute.xlu0 %628
    %vm630 = vcmp.lt.s32.totalorder %v380, 113
    %v631 = vsel %vm630, %v615, %v623
    %v632 = vsel %vm630, %v617, %v625
    %v633 = vsel %vm630, %v619, %v627
    %v634 = vsel %vm630, %v621, %v629
    %v635 = vsel %vm630, %v623, %v615
    %v636 = vsel %vm630, %v625, %v617
    %v637 = vsel %vm630, %v627, %v619
    %v638 = vsel %vm630, %v629, %v621
    %s639 = scalar_lea.vmem [#allocation2], 384
    %v640 = vld [vmem:[%s639] sm:$0xff]
    %v641 = vld [vmem:[%s639 + $0x8] sm:$0xff]
    %v642 = vld [vmem:[%s639 + $0x10] sm:$0xff]
    %v643 = vld [vmem:[%s639 + $0x18] sm:$0xff]
    %v644 = vld [vmem:[%s639 + $0x20] sm:$0xff]
    %v645 = vld [vmem:[%s639 + $0x28] sm:$0xff]
    %v646 = vld [vmem:[%s639 + $0x30] sm:$0xff]
    %v647 = vld [vmem:[%s639 + $0x38] sm:$0xff]
    %v648 = vmul.f32 %v631, %v640
    %v649 = vmul.f32 %v635, %v641
    %v650 = vmul.f32 %v632, %v642
    %v651 = vmul.f32 %v636, %v643
    %v652 = vmul.f32 %v633, %v644
    %v653 = vmul.f32 %v637, %v645
    %v654 = vmul.f32 %v634, %v646
    %v655 = vmul.f32 %v638, %v647
    %v656 = vadd.f32 %v606, %v648
    %v657 = vadd.f32 %v607, %v649
    %v658 = vadd.f32 %v608, %v650
    %v659 = vadd.f32 %v609, %v651
    %v660 = vadd.f32 %v610, %v652
    %v661 = vadd.f32 %v611, %v653
    %v662 = vadd.f32 %v612, %v654
    %v663 = vadd.f32 %v613, %v655
    %664 = vrot.lane.b32.xlu0 %v338, 112
    %v665 = vpop.permute.xlu0 %664
    %666 = vrot.lane.b32.xlu0 %v340, 112
    %v667 = vpop.permute.xlu0 %666
    %668 = vrot.lane.b32.xlu0 %v342, 112
    %v669 = vpop.permute.xlu0 %668
    %670 = vrot.lane.b32.xlu0 %v344, 112
    %v671 = vpop.permute.xlu0 %670
    %672 = vrot.lane.b32.xlu0 %v339, 112
    %v673 = vpop.permute.xlu0 %672
    %674 = vrot.lane.b32.xlu0 %v341, 112
    %v675 = vpop.permute.xlu0 %674
    %676 = vrot.lane.b32.xlu0 %v343, 112
    %v677 = vpop.permute.xlu0 %676
    %678 = vrot.lane.b32.xlu0 %v345, 112
    %v679 = vpop.permute.xlu0 %678
    %vm680 = vcmp.lt.s32.totalorder %v380, 112
    %v681 = vsel %vm680, %v665, %v673
    %v682 = vsel %vm680, %v667, %v675
    %v683 = vsel %vm680, %v669, %v677
    %v684 = vsel %vm680, %v671, %v679
    %v685 = vsel %vm680, %v673, %v665
    %v686 = vsel %vm680, %v675, %v667
    %v687 = vsel %vm680, %v677, %v669
    %v688 = vsel %vm680, %v679, %v671
    %s689 = scalar_lea.vmem [#allocation2], 448
    %v690 = vld [vmem:[%s689] sm:$0xff]
    %v691 = vld [vmem:[%s689 + $0x8] sm:$0xff]
    %v692 = vld [vmem:[%s689 + $0x10] sm:$0xff]
    %v693 = vld [vmem:[%s689 + $0x18] sm:$0xff]
    %v694 = vld [vmem:[%s689 + $0x20] sm:$0xff]
    %v695 = vld [vmem:[%s689 + $0x28] sm:$0xff]
    %v696 = vld [vmem:[%s689 + $0x30] sm:$0xff]
    %v697 = vld [vmem:[%s689 + $0x38] sm:$0xff]
    %v698 = vmul.f32 %v681, %v690
    %v699 = vmul.f32 %v685, %v691
    %v700 = vmul.f32 %v682, %v692
    %v701 = vmul.f32 %v686, %v693
    %v702 = vmul.f32 %v683, %v694
    %v703 = vmul.f32 %v687, %v695
    %v704 = vmul.f32 %v684, %v696
    %v705 = vmul.f32 %v688, %v697
    %v706 = vadd.f32 %v656, %v698
    %v707 = vadd.f32 %v657, %v699
    %v708 = vadd.f32 %v658, %v700
    %v709 = vadd.f32 %v659, %v701
    %v710 = vadd.f32 %v660, %v702
    %v711 = vadd.f32 %v661, %v703
    %v712 = vadd.f32 %v662, %v704
    %v713 = vadd.f32 %v663, %v705
    %714 = vrot.lane.b32.xlu0 %v338, 111
    %v715 = vpop.permute.xlu0 %714
    %716 = vrot.lane.b32.xlu0 %v340, 111
    %v717 = vpop.permute.xlu0 %716
    %718 = vrot.lane.b32.xlu0 %v342, 111
    %v719 = vpop.permute.xlu0 %718
    %720 = vrot.lane.b32.xlu0 %v344, 111
    %v721 = vpop.permute.xlu0 %720
    %722 = vrot.lane.b32.xlu0 %v339, 111
    %v723 = vpop.permute.xlu0 %722
    %724 = vrot.lane.b32.xlu0 %v341, 111
    %v725 = vpop.permute.xlu0 %724
    %726 = vrot.lane.b32.xlu0 %v343, 111
    %v727 = vpop.permute.xlu0 %726
    %728 = vrot.lane.b32.xlu0 %v345, 111
    %v729 = vpop.permute.xlu0 %728
    %vm730 = vcmp.lt.s32.totalorder %v380, 111
    %v731 = vsel %vm730, %v715, %v723
    %v732 = vsel %vm730, %v717, %v725
    %v733 = vsel %vm730, %v719, %v727
    %v734 = vsel %vm730, %v721, %v729
    %v735 = vsel %vm730, %v723, %v715
    %v736 = vsel %vm730, %v725, %v717
    %v737 = vsel %vm730, %v727, %v719
    %v738 = vsel %vm730, %v729, %v721
    %s739 = scalar_lea.vmem [#allocation2], 512
    %v740 = vld [vmem:[%s739] sm:$0xff]
    %v741 = vld [vmem:[%s739 + $0x8] sm:$0xff]
    %v742 = vld [vmem:[%s739 + $0x10] sm:$0xff]
    %v743 = vld [vmem:[%s739 + $0x18] sm:$0xff]
    %v744 = vld [vmem:[%s739 + $0x20] sm:$0xff]
    %v745 = vld [vmem:[%s739 + $0x28] sm:$0xff]
    %v746 = vld [vmem:[%s739 + $0x30] sm:$0xff]
    %v747 = vld [vmem:[%s739 + $0x38] sm:$0xff]
    %v748 = vmul.f32 %v731, %v740
    %v749 = vmul.f32 %v735, %v741
    %v750 = vmul.f32 %v732, %v742
    %v751 = vmul.f32 %v736, %v743
    %v752 = vmul.f32 %v733, %v744
    %v753 = vmul.f32 %v737, %v745
    %v754 = vmul.f32 %v734, %v746
    %v755 = vmul.f32 %v738, %v747
    %v756 = vadd.f32 %v706, %v748
    %v757 = vadd.f32 %v707, %v749
    %v758 = vadd.f32 %v708, %v750
    %v759 = vadd.f32 %v709, %v751
    %v760 = vadd.f32 %v710, %v752
    %v761 = vadd.f32 %v711, %v753
    %v762 = vadd.f32 %v712, %v754
    %v763 = vadd.f32 %v713, %v755
    %v764 = vld [vmem:[%s4] sm:$0xff]
    %v765 = vld [vmem:[%s4 + $0x8] sm:$0xff]
    %767 = vset.pattern.permute.xlu0 0
    %768 = vperm.xlu0 %767, %v764
    %v769 = vpop.permute.xlu0 %768
    %772 = vset.pattern.permute.xlu0 0
    %773 = vperm.xlu0 %772, %v765
    %v774 = vpop.permute.xlu0 %773
    %v776 = vadd.f32 %v756, %v769
    %v777 = vadd.f32 %v757, %v769
    %v778 = vadd.f32 %v758, %v774
    %v779 = vadd.f32 %v759, %v774
    %v780 = vadd.f32 %v760, %v769
    %v781 = vadd.f32 %v761, %v769
    %v782 = vadd.f32 %v762, %v774
    %v783 = vadd.f32 %v763, %v774
    %v784 = vmul.f32 %v776, %v305
    %v785 = vmul.f32 %v777, %v305
    %v786 = vmul.f32 %v778, %v305
    %v787 = vmul.f32 %v779, %v305
    %v788 = vmul.f32 %v780, %v305
    %v789 = vmul.f32 %v781, %v305
    %v790 = vmul.f32 %v782, %v305
    %v791 = vmul.f32 %v783, %v305
    %v792 = vadd.f32 %v784, 0.5
    %v793 = vadd.f32 %v785, 0.5
    %v794 = vadd.f32 %v786, 0.5
    %v795 = vadd.f32 %v787, 0.5
    %v796 = vadd.f32 %v788, 0.5
    %v797 = vadd.f32 %v789, 0.5
    %v798 = vadd.f32 %v790, 0.5
    %v799 = vadd.f32 %v791, 0.5
    %v800 = vmax.f32 %v792, 0.0
    %v801 = vmax.f32 %v793, 0.0
    %v802 = vmax.f32 %v794, 0.0
    %v803 = vmax.f32 %v795, 0.0
    %v804 = vmax.f32 %v796, 0.0
    %v805 = vmax.f32 %v797, 0.0
    %v806 = vmax.f32 %v798, 0.0
    %v807 = vmax.f32 %v799, 0.0
    %v808 = vmin.f32 %v800, 1.0
    %v809 = vmin.f32 %v801, 1.0
    %v810 = vmin.f32 %v802, 1.0
    %v811 = vmin.f32 %v803, 1.0
    %v812 = vmin.f32 %v804, 1.0
    %v813 = vmin.f32 %v805, 1.0
    %v814 = vmin.f32 %v806, 1.0
    %v815 = vmin.f32 %v807, 1.0
    %v816 = vmul.f32 %v776, %v808
    %v817 = vmul.f32 %v777, %v809
    %v818 = vmul.f32 %v778, %v810
    %v819 = vmul.f32 %v779, %v811
    %v820 = vmul.f32 %v780, %v812
    %v821 = vmul.f32 %v781, %v813
    %v822 = vmul.f32 %v782, %v814
    %v823 = vmul.f32 %v783, %v815
    %v824 = vadd.f32 %v816, %v817
    %825 = vadd.xlane.f32.xlu0 %v824
    %v826 = vpop.xlane.xlu0 %825
    %v827 = vadd.f32 %v818, %v819
    %828 = vadd.xlane.f32.xlu0 %v827
    %v829 = vpop.xlane.xlu0 %828
    %v830 = vadd.f32 %v820, %v821
    %831 = vadd.xlane.f32.xlu0 %v830
    %v832 = vpop.xlane.xlu0 %831
    %v833 = vadd.f32 %v822, %v823
    %834 = vadd.xlane.f32.xlu0 %v833
    %v835 = vpop.xlane.xlu0 %834
    %v836 = vmul.f32 %v826, 0.00390625
    %v837 = vmul.f32 %v829, 0.00390625
    %v838 = vmul.f32 %v832, 0.00390625
    %v839 = vmul.f32 %v835, 0.00390625
    %v840 = vld [vmem:[%s5] sm:$0xff]
    %v841 = vld [vmem:[%s5 + $0x8] sm:$0xff]
    %v842 = vmul.f32 %v840, %v836
    %v843 = vmul.f32 %v841, %v837
    %v844 = vmul.f32 %v840, %v838
    %v845 = vmul.f32 %v841, %v839
    %vm846 = vcmask 31744
    %v847 = vsel %vm846, %v842, 0.0
    %v848 = vsel %vm846, %v843, 0.0
    %v849 = vadd.f32 %v847, %v848
    %v850 = vrot.slane %v849, 4
    %v851 = vadd.f32 %v849, %v850
    %v852 = vrot.slane %v851, 2
    %v853 = vadd.f32 %v851, %v852
    %v854 = vrot.slane %v853, 1
    %v855 = vadd.f32 %v853, %v854
    %v856 = vsel %vm846, %v844, 0.0
    %v857 = vsel %vm846, %v845, 0.0
    %v858 = vadd.f32 %v856, %v857
    %v859 = vrot.slane %v858, 4
    %v860 = vadd.f32 %v858, %v859
    %v861 = vrot.slane %v860, 2
    %v862 = vadd.f32 %v860, %v861
    %v863 = vrot.slane %v862, 1
    %v864 = vadd.f32 %v862, %v863
    %v865 = vld [vmem:[%s6] sm:$0x1]
    %v866 = vadd.f32 %v855, %v865
    %v867 = vadd.f32 %v864, %v865
    %v868 = vmax.f32 %v866, 0.0
    %v869 = vmax.f32 %v867, 0.0
    %v870 = vld [vmem:[%s7] sm:$0xff]
    %v871 = vld [vmem:[%s7 + $0x8] sm:$0xff]
    %v872 = vperm.slane %v868, 0
    %v873 = vperm.slane %v869, 0
    %v874 = vmul.f32 %v870, %v872
    %v875 = vmul.f32 %v871, %v872
    %v876 = vmul.f32 %v870, %v873
    %v877 = vmul.f32 %v871, %v873
    %v878 = vsel %vm846, %v874, 0.0
    %879 = vadd.xlane.f32.xlu0 %v878
    %v880 = vpop.xlane.xlu0 %879
    %v881 = vsel %vm846, %v875, 0.0
    %882 = vadd.xlane.f32.xlu0 %v881
    %v883 = vpop.xlane.xlu0 %882
    %v884 = vsel %vm846, %v876, 0.0
    %885 = vadd.xlane.f32.xlu0 %v884
    %v886 = vpop.xlane.xlu0 %885
    %v887 = vsel %vm846, %v877, 0.0
    %888 = vadd.xlane.f32.xlu0 %v887
    %v889 = vpop.xlane.xlu0 %888
    %v890 = vld [vmem:[%s8] sm:$0xff]
    %v891 = vld [vmem:[%s8 + $0x8] sm:$0xff]
    %v892 = vadd.f32 %v880, %v890
    %v893 = vadd.f32 %v883, %v891
    %v894 = vadd.f32 %v886, %v890
    %v895 = vadd.f32 %v889, %v891
    %v896 = vmul.f32 %v892, 0.16666667
    %v897 = vmul.f32 %v893, 0.16666667
    %v898 = vmul.f32 %v894, 0.16666667
    %v899 = vmul.f32 %v895, 0.16666667
    %v900 = vadd.f32 %v896, 0.5
    %v901 = vadd.f32 %v897, 0.5
    %v902 = vadd.f32 %v898, 0.5
    %v903 = vadd.f32 %v899, 0.5
    %v904 = vmax.f32 %v900, 0.0
    %v905 = vmax.f32 %v901, 0.0
    %v906 = vmax.f32 %v902, 0.0
    %v907 = vmax.f32 %v903, 0.0
    %v908 = vmin.f32 %v904, 1.0
    %v909 = vmin.f32 %v905, 1.0
    %v910 = vmin.f32 %v906, 1.0
    %v911 = vmin.f32 %v907, 1.0
    %913 = vset.pattern.permute.xlu0 0
    %914 = vperm.xlu0 %913, %v908
    %v915 = vpop.permute.xlu0 %914
    %918 = vset.pattern.permute.xlu0 0
    %919 = vperm.xlu0 %918, %v909
    %v920 = vpop.permute.xlu0 %919
    %923 = vset.pattern.permute.xlu0 0
    %924 = vperm.xlu0 %923, %v910
    %v925 = vpop.permute.xlu0 %924
    %928 = vset.pattern.permute.xlu0 0
    %929 = vperm.xlu0 %928, %v911
    %v930 = vpop.permute.xlu0 %929
    %v932 = vmul.f32 %v816, %v915
    %v933 = vmul.f32 %v817, %v915
    %v934 = vmul.f32 %v818, %v920
    %v935 = vmul.f32 %v819, %v920
    %v936 = vmul.f32 %v820, %v925
    %v937 = vmul.f32 %v821, %v925
    %v938 = vmul.f32 %v822, %v930
    %v939 = vmul.f32 %v823, %v930
    %v940 = vld [vmem:[%s9] sm:$0xff]
    %v941 = vperm.slane %v932, 0
    %v942 = vperm.slane %v933, 0
    %v943 = vperm.slane %v936, 0
    %v944 = vperm.slane %v937, 0
    %946 = vset.pattern.permute.xlu0 0
    %947 = vperm.xlu0 %946, %v940
    %v948 = vpop.permute.xlu0 %947
    %v950 = vmul.f32 %v941, %v948
    %v951 = vmul.f32 %v942, %v948
    %v952 = vmul.f32 %v943, %v948
    %v953 = vmul.f32 %v944, %v948
    %v954 = vperm.slane %v932, 1
    %v955 = vperm.slane %v933, 1
    %v956 = vperm.slane %v936, 1
    %v957 = vperm.slane %v937, 1
    %958 = vset.pattern.permute.xlu0 1
    %959 = vperm.xlu0 %958, %v940
    %v960 = vpop.permute.xlu0 %959
    %v962 = vmul.f32 %v954, %v960
    %v963 = vmul.f32 %v955, %v960
    %v964 = vmul.f32 %v956, %v960
    %v965 = vmul.f32 %v957, %v960
    %v966 = vadd.f32 %v950, %v962
    %v967 = vadd.f32 %v951, %v963
    %v968 = vadd.f32 %v952, %v964
    %v969 = vadd.f32 %v953, %v965
    %v970 = vperm.slane %v932, 2
    %v971 = vperm.slane %v933, 2
    %v972 = vperm.slane %v936, 2
    %v973 = vperm.slane %v937, 2
    %974 = vset.pattern.permute.xlu0 2
    %975 = vperm.xlu0 %974, %v940
    %v976 = vpop.permute.xlu0 %975
    %v978 = vmul.f32 %v970, %v976
    %v979 = vmul.f32 %v971, %v976
    %v980 = vmul.f32 %v972, %v976
    %v981 = vmul.f32 %v973, %v976
    %v982 = vadd.f32 %v966, %v978
    %v983 = vadd.f32 %v967, %v979
    %v984 = vadd.f32 %v968, %v980
    %v985 = vadd.f32 %v969, %v981
    %v986 = vperm.slane %v932, 3
    %v987 = vperm.slane %v933, 3
    %v988 = vperm.slane %v936, 3
    %v989 = vperm.slane %v937, 3
    %990 = vset.pattern.permute.xlu0 3
    %991 = vperm.xlu0 %990, %v940
    %v992 = vpop.permute.xlu0 %991
    %v994 = vmul.f32 %v986, %v992
    %v995 = vmul.f32 %v987, %v992
    %v996 = vmul.f32 %v988, %v992
    %v997 = vmul.f32 %v989, %v992
    %v998 = vadd.f32 %v982, %v994
    %v999 = vadd.f32 %v983, %v995
    %v1000 = vadd.f32 %v984, %v996
    %v1001 = vadd.f32 %v985, %v997
    %v1002 = vperm.slane %v932, 4
    %v1003 = vperm.slane %v933, 4
    %v1004 = vperm.slane %v936, 4
    %v1005 = vperm.slane %v937, 4
    %1006 = vset.pattern.permute.xlu0 4
    %1007 = vperm.xlu0 %1006, %v940
    %v1008 = vpop.permute.xlu0 %1007
    %v1010 = vmul.f32 %v1002, %v1008
    %v1011 = vmul.f32 %v1003, %v1008
    %v1012 = vmul.f32 %v1004, %v1008
    %v1013 = vmul.f32 %v1005, %v1008
    %v1014 = vadd.f32 %v998, %v1010
    %v1015 = vadd.f32 %v999, %v1011
    %v1016 = vadd.f32 %v1000, %v1012
    %v1017 = vadd.f32 %v1001, %v1013
    %v1018 = vperm.slane %v932, 5
    %v1019 = vperm.slane %v933, 5
    %v1020 = vperm.slane %v936, 5
    %v1021 = vperm.slane %v937, 5
    %1022 = vset.pattern.permute.xlu0 5
    %1023 = vperm.xlu0 %1022, %v940
    %v1024 = vpop.permute.xlu0 %1023
    %v1026 = vmul.f32 %v1018, %v1024
    %v1027 = vmul.f32 %v1019, %v1024
    %v1028 = vmul.f32 %v1020, %v1024
    %v1029 = vmul.f32 %v1021, %v1024
    %v1030 = vadd.f32 %v1014, %v1026
    %v1031 = vadd.f32 %v1015, %v1027
    %v1032 = vadd.f32 %v1016, %v1028
    %v1033 = vadd.f32 %v1017, %v1029
    %v1034 = vperm.slane %v932, 6
    %v1035 = vperm.slane %v933, 6
    %v1036 = vperm.slane %v936, 6
    %v1037 = vperm.slane %v937, 6
    %1038 = vset.pattern.permute.xlu0 6
    %1039 = vperm.xlu0 %1038, %v940
    %v1040 = vpop.permute.xlu0 %1039
    %v1042 = vmul.f32 %v1034, %v1040
    %v1043 = vmul.f32 %v1035, %v1040
    %v1044 = vmul.f32 %v1036, %v1040
    %v1045 = vmul.f32 %v1037, %v1040
    %v1046 = vadd.f32 %v1030, %v1042
    %v1047 = vadd.f32 %v1031, %v1043
    %v1048 = vadd.f32 %v1032, %v1044
    %v1049 = vadd.f32 %v1033, %v1045
    %v1050 = vperm.slane %v932, 7
    %v1051 = vperm.slane %v933, 7
    %v1052 = vperm.slane %v936, 7
    %v1053 = vperm.slane %v937, 7
    %1054 = vset.pattern.permute.xlu0 7
    %1055 = vperm.xlu0 %1054, %v940
    %v1056 = vpop.permute.xlu0 %1055
    %v1058 = vmul.f32 %v1050, %v1056
    %v1059 = vmul.f32 %v1051, %v1056
    %v1060 = vmul.f32 %v1052, %v1056
    %v1061 = vmul.f32 %v1053, %v1056
    %v1062 = vadd.f32 %v1046, %v1058
    %v1063 = vadd.f32 %v1047, %v1059
    %v1064 = vadd.f32 %v1048, %v1060
    %v1065 = vadd.f32 %v1049, %v1061
    %v1066 = vperm.slane %v934, 0
    %v1067 = vperm.slane %v935, 0
    %v1068 = vperm.slane %v938, 0
    %v1069 = vperm.slane %v939, 0
    %1070 = vset.pattern.permute.xlu0 8
    %1071 = vperm.xlu0 %1070, %v940
    %v1072 = vpop.permute.xlu0 %1071
    %v1074 = vmul.f32 %v1066, %v1072
    %v1075 = vmul.f32 %v1067, %v1072
    %v1076 = vmul.f32 %v1068, %v1072
    %v1077 = vmul.f32 %v1069, %v1072
    %v1078 = vadd.f32 %v1062, %v1074
    %v1079 = vadd.f32 %v1063, %v1075
    %v1080 = vadd.f32 %v1064, %v1076
    %v1081 = vadd.f32 %v1065, %v1077
    %v1082 = vperm.slane %v934, 1
    %v1083 = vperm.slane %v935, 1
    %v1084 = vperm.slane %v938, 1
    %v1085 = vperm.slane %v939, 1
    %1086 = vset.pattern.permute.xlu0 9
    %1087 = vperm.xlu0 %1086, %v940
    %v1088 = vpop.permute.xlu0 %1087
    %v1090 = vmul.f32 %v1082, %v1088
    %v1091 = vmul.f32 %v1083, %v1088
    %v1092 = vmul.f32 %v1084, %v1088
    %v1093 = vmul.f32 %v1085, %v1088
    %v1094 = vadd.f32 %v1078, %v1090
    %v1095 = vadd.f32 %v1079, %v1091
    %v1096 = vadd.f32 %v1080, %v1092
    %v1097 = vadd.f32 %v1081, %v1093
    %v1098 = vperm.slane %v934, 2
    %v1099 = vperm.slane %v935, 2
    %v1100 = vperm.slane %v938, 2
    %v1101 = vperm.slane %v939, 2
    %1102 = vset.pattern.permute.xlu0 10
    %1103 = vperm.xlu0 %1102, %v940
    %v1104 = vpop.permute.xlu0 %1103
    %v1106 = vmul.f32 %v1098, %v1104
    %v1107 = vmul.f32 %v1099, %v1104
    %v1108 = vmul.f32 %v1100, %v1104
    %v1109 = vmul.f32 %v1101, %v1104
    %v1110 = vadd.f32 %v1094, %v1106
    %v1111 = vadd.f32 %v1095, %v1107
    %v1112 = vadd.f32 %v1096, %v1108
    %v1113 = vadd.f32 %v1097, %v1109
    %v1114 = vperm.slane %v934, 3
    %v1115 = vperm.slane %v935, 3
    %v1116 = vperm.slane %v938, 3
    %v1117 = vperm.slane %v939, 3
    %1118 = vset.pattern.permute.xlu0 11
    %1119 = vperm.xlu0 %1118, %v940
    %v1120 = vpop.permute.xlu0 %1119
    %v1122 = vmul.f32 %v1114, %v1120
    %v1123 = vmul.f32 %v1115, %v1120
    %v1124 = vmul.f32 %v1116, %v1120
    %v1125 = vmul.f32 %v1117, %v1120
    %v1126 = vadd.f32 %v1110, %v1122
    %v1127 = vadd.f32 %v1111, %v1123
    %v1128 = vadd.f32 %v1112, %v1124
    %v1129 = vadd.f32 %v1113, %v1125
    %v1130 = vperm.slane %v934, 4
    %v1131 = vperm.slane %v935, 4
    %v1132 = vperm.slane %v938, 4
    %v1133 = vperm.slane %v939, 4
    %1134 = vset.pattern.permute.xlu0 12
    %1135 = vperm.xlu0 %1134, %v940
    %v1136 = vpop.permute.xlu0 %1135
    %v1138 = vmul.f32 %v1130, %v1136
    %v1139 = vmul.f32 %v1131, %v1136
    %v1140 = vmul.f32 %v1132, %v1136
    %v1141 = vmul.f32 %v1133, %v1136
    %v1142 = vadd.f32 %v1126, %v1138
    %v1143 = vadd.f32 %v1127, %v1139
    %v1144 = vadd.f32 %v1128, %v1140
    %v1145 = vadd.f32 %v1129, %v1141
    %v1146 = vperm.slane %v934, 5
    %v1147 = vperm.slane %v935, 5
    %v1148 = vperm.slane %v938, 5
    %v1149 = vperm.slane %v939, 5
    %1150 = vset.pattern.permute.xlu0 13
    %1151 = vperm.xlu0 %1150, %v940
    %v1152 = vpop.permute.xlu0 %1151
    %v1154 = vmul.f32 %v1146, %v1152
    %v1155 = vmul.f32 %v1147, %v1152
    %v1156 = vmul.f32 %v1148, %v1152
    %v1157 = vmul.f32 %v1149, %v1152
    %v1158 = vadd.f32 %v1142, %v1154
    %v1159 = vadd.f32 %v1143, %v1155
    %v1160 = vadd.f32 %v1144, %v1156
    %v1161 = vadd.f32 %v1145, %v1157
    %v1162 = vperm.slane %v934, 6
    %v1163 = vperm.slane %v935, 6
    %v1164 = vperm.slane %v938, 6
    %v1165 = vperm.slane %v939, 6
    %1166 = vset.pattern.permute.xlu0 14
    %1167 = vperm.xlu0 %1166, %v940
    %v1168 = vpop.permute.xlu0 %1167
    %v1170 = vmul.f32 %v1162, %v1168
    %v1171 = vmul.f32 %v1163, %v1168
    %v1172 = vmul.f32 %v1164, %v1168
    %v1173 = vmul.f32 %v1165, %v1168
    %v1174 = vadd.f32 %v1158, %v1170
    %v1175 = vadd.f32 %v1159, %v1171
    %v1176 = vadd.f32 %v1160, %v1172
    %v1177 = vadd.f32 %v1161, %v1173
    %v1178 = vperm.slane %v934, 7
    %v1179 = vperm.slane %v935, 7
    %v1180 = vperm.slane %v938, 7
    %v1181 = vperm.slane %v939, 7
    %1182 = vset.pattern.permute.xlu0 15
    %1183 = vperm.xlu0 %1182, %v940
    %v1184 = vpop.permute.xlu0 %1183
    %v1186 = vmul.f32 %v1178, %v1184
    %v1187 = vmul.f32 %v1179, %v1184
    %v1188 = vmul.f32 %v1180, %v1184
    %v1189 = vmul.f32 %v1181, %v1184
    %v1190 = vadd.f32 %v1174, %v1186
    %v1191 = vadd.f32 %v1175, %v1187
    %v1192 = vadd.f32 %v1176, %v1188
    %v1193 = vadd.f32 %v1177, %v1189
    %v1194 = vld [vmem:[%s10] sm:$0xff]
    %1196 = vset.pattern.permute.xlu0 0
    %1197 = vperm.xlu0 %1196, %v1194
    %v1198 = vpop.permute.xlu0 %1197
    %v1200 = vadd.f32 %v1190, %v1198
    %v1201 = vadd.f32 %v1191, %v1198
    %v1202 = vadd.f32 %v1192, %v1198
    %v1203 = vadd.f32 %v1193, %v1198
    %v1204 = vadd.f32 %v1200, %v55
    %v1205 = vadd.f32 %v1201, %v56
    %v1206 = vadd.f32 %v1202, %v57
    %v1207 = vadd.f32 %v1203, %v58
    %1208 = vst [vmem:[#allocation5] sm:$0xff] %v1204
    %1209 = vst [vmem:[#allocation5 + $0x8] sm:$0xff] %v1205
    %1210 = vst [vmem:[#allocation5 + $0x10] sm:$0xff] %v1206
    %1211 = vst [vmem:[#allocation5 + $0x18] sm:$0xff] %v1207
    // Predicated region
    $region50: #{tpu_custom_call.1} parent=1 // pred_check
      _
    $region51: #{tpu_custom_call.1} parent=1 // pred_check_branch
      %1213 = sbr.rel (0) target = $region53
    $region52: #{tpu_custom_call.1} parent=1 // pred_region
      %1215 = vsyncadd [#allocation4], 0
      %s1216 = sshll.u32 [#allocation5], 4
      %s1217 = int_to_ptr.vmem [resolvable:$true] %s1216
      %s1218 = sshll.u32 %s11, 4
      %s1219 = int_to_ptr.hbm [resolvable:$true] %s1218
      %1224 = dma.vmem_to_hbm [thread:$0]  %s1217, 512, %s1219, [#allocation4], 256, 256, 16
    $region53: #{tpu_custom_call.1} parent=1 // pred_fallthru
      _
    // Predicated region
    $region54: #{tpu_custom_call.1} parent=1 // pred_check
      _
    $region55: #{tpu_custom_call.1} parent=1 // pred_check_branch
      %1226 = sbr.rel (0) target = $region57
    $region56: #{tpu_custom_call.1} parent=1 // pred_region
      %1228 = dma.done [#allocation4], 512
    $region57: #{tpu_custom_call.1} parent=1 // pred_fallthru
      _
    %1229 = vsyncpa [#allocation3], 1
    %1230 = vsyncpa [#allocation4], 1

</llo_original>
